<compile_context>
chip_gen: v7x
topology: tpu7x:2x2x1
jax: 0.10.0
libtpu: 0.0.40
codegen_flags: <defaults>
</compile_context>

<pallas_src>
import jax
import jax.numpy as jnp
from jax.experimental import pallas as pl
from jax.experimental.pallas import tpu as pltpu

HIDDEN = 256
LANE = 128


def _round_up(n, m):
    return ((n + m - 1) // m) * m


def actor_mlp_kernel(x_ref,
                     w1_ref, b1_ref,
                     w2_ref, b2_ref,
                     w3_ref, b3_ref,
                     w4_ref, b4_ref,
                     out_ref):
    """Fused 4-layer MLP; bf16 MXU matmuls with f32 accumulation, f32 tanh."""
    x = x_ref[...].astype(jnp.bfloat16)

    h = jnp.dot(x, w1_ref[...], preferred_element_type=jnp.float32) + b1_ref[...]
    h = jnp.tanh(h)                                        # f32 on VPU/EUP
    h = jnp.dot(h.astype(jnp.bfloat16), w2_ref[...],
                preferred_element_type=jnp.float32) + b2_ref[...]
    h = jnp.tanh(h)
    h = jnp.dot(h.astype(jnp.bfloat16), w3_ref[...],
                preferred_element_type=jnp.float32) + b3_ref[...]
    h = jnp.tanh(h)
    y = jnp.dot(h.astype(jnp.bfloat16), w4_ref[...],
                preferred_element_type=jnp.float32) + b4_ref[...]

    out_ref[...] = y.astype(out_ref.dtype)


def actor_forward(x, params, *, batch_tile=256):
    """Run the actor MLP via a single fused Pallas kernel, tiled over batch."""
    (w1, b1), (w2, b2), (w3, b3), (w4, b4) = params
    B, state_dim = x.shape
    action_dim = w4.shape[1]

    # Lane-dense output: zero-pad the last layer to a multiple of 128 lanes so
    # the output store is an unmasked full-lane vst; slice back afterwards.
    out_pad = _round_up(action_dim, LANE)
    if out_pad != action_dim:
        w4p = jnp.zeros((w4.shape[0], out_pad), w4.dtype).at[:, :action_dim].set(w4)
        b4p = jnp.zeros((1, out_pad), b4.dtype).at[:, :action_dim].set(b4)
    else:
        w4p, b4p = w4, b4

    # Large batch tiles; pad batch up to a tile multiple (padded rows are
    # computed and discarded — negligible cost, keeps BlockSpecs (8,128)-legal).
    tile = min(batch_tile, _round_up(B, 8))
    Bp = _round_up(B, tile)
    xp = x if Bp == B else jnp.pad(x, ((0, Bp - B), (0, 0)))

    grid = (Bp // tile,)

    # Weights / biases are broadcast to every batch tile (constant index_map
    # -> they stay resident in VMEM across grid steps, no re-DMA).
    full = lambda arr: pl.BlockSpec(arr.shape, lambda i: (0, 0))

    flops = 2 * Bp * (state_dim * HIDDEN + 2 * HIDDEN * HIDDEN + HIDDEN * out_pad)
    bytes_accessed = (
        int(xp.size) * xp.dtype.itemsize
        + sum(int(a.size) * a.dtype.itemsize
              for a in (w1, b1, w2, b2, w3, b3, w4p, b4p))
        + Bp * out_pad * 4)

    out = pl.pallas_call(
        actor_mlp_kernel,
        out_shape=jax.ShapeDtypeStruct((Bp, out_pad), jnp.float32),
        grid=grid,
        in_specs=[
            pl.BlockSpec((tile, state_dim), lambda i: (i, 0)),  # x tile
            full(w1), full(b1),
            full(w2), full(b2),
            full(w3), full(b3),
            full(w4p), full(b4p),
        ],
        out_specs=pl.BlockSpec((tile, out_pad), lambda i: (i, 0)),
        compiler_params=pltpu.CompilerParams(
            dimension_semantics=("parallel",)),
        cost_estimate=pl.CostEstimate(
            flops=flops,
            transcendentals=3 * Bp * HIDDEN,
            bytes_accessed=bytes_accessed),
    )(xp, w1, b1, w2, b2, w3, b3, w4p, b4p)

    return out[:B, :action_dim]


def orthogonal_linear_init(key, in_dim, out_dim, std, *, w_dtype=jnp.bfloat16):
    """Deterministic stand-in for torch.nn.init.orthogonal_(weight, std).

    PyTorch Linear weight is (out, in); we build an orthogonal (out, in) matrix,
    scale by std, transpose to the (in, out) layout used by the kernel, and
    cast to bf16 (MXU-native). Bias is 0 (bias_const=0.0 in layer_init), f32.
    """
    a = jax.random.normal(key, (out_dim, in_dim), dtype=jnp.float32)
    if out_dim >= in_dim:
        q, r = jnp.linalg.qr(a)                       # q: (out, in)
    else:
        q, r = jnp.linalg.qr(a.T)                     # q: (in, out)
        q = q.T
    d = jnp.sign(jnp.diagonal(r))
    q = q * d[None, :] if out_dim >= in_dim else q * d[:, None]
    w = (std * q).T.astype(w_dtype)                   # (in, out), bf16
    b = jnp.zeros((1, out_dim), dtype=jnp.float32)    # 2D bias for TPU layout
    return w, b


def make_actor_params(key, state_dim, action_dim):
    k1, k2, k3, k4 = jax.random.split(key, 4)
    sqrt2 = float(jnp.sqrt(2.0))
    p1 = orthogonal_linear_init(k1, state_dim, HIDDEN, sqrt2)
    p2 = orthogonal_linear_init(k2, HIDDEN, HIDDEN, sqrt2)
    p3 = orthogonal_linear_init(k3, HIDDEN, HIDDEN, sqrt2)
    p4 = orthogonal_linear_init(k4, HIDDEN, action_dim, 0.01 * sqrt2)
    return (p1, p2, p3, p4)


def actor_forward_ref(x, params):
    """Pure-JAX reference with identical bf16-in / f32-accumulate casting."""
    (w1, b1), (w2, b2), (w3, b3), (w4, b4) = params

    def lin(h, w, b):
        return jnp.dot(h.astype(w.dtype), w,
                       preferred_element_type=jnp.float32) + b

    h = jnp.tanh(lin(x, w1, b1))
    h = jnp.tanh(lin(h, w2, b2))
    h = jnp.tanh(lin(h, w3, b3))
    return lin(h, w4, b4)


if __name__ == "__main__":
    key = jax.random.PRNGKey(0)
    k_params, k_x = jax.random.split(key)

    batch = 512         # 2 tiles of 256 -> both v7x TensorCores get a tile
    state_dim = 32
    action_dim = 8

    params = make_actor_params(k_params, state_dim, action_dim)
    x = jax.random.normal(k_x, (batch, state_dim), dtype=jnp.float32)

    out = jax.block_until_ready(actor_forward(x, params, batch_tile=256))
    ref = actor_forward_ref(x, params)

    assert out.shape == (batch, action_dim)
    assert jnp.allclose(out, ref, atol=2e-3, rtol=2e-3), "mismatch vs JAX reference"

    print("KERNEL_OK")
</pallas_src>

<mosaic_0001>
module attributes {stable_mosaic.version = 11 : i64} {
  func.func @actor_mlp_kernel(%arg0: i32, %arg1: memref<256x32xf32, #tpu.memory_space<vmem>>, %arg2: memref<32x256xbf16, #tpu.memory_space<vmem>>, %arg3: memref<1x256xf32, #tpu.memory_space<vmem>>, %arg4: memref<256x256xbf16, #tpu.memory_space<vmem>>, %arg5: memref<1x256xf32, #tpu.memory_space<vmem>>, %arg6: memref<256x256xbf16, #tpu.memory_space<vmem>>, %arg7: memref<1x256xf32, #tpu.memory_space<vmem>>, %arg8: memref<256x128xbf16, #tpu.memory_space<vmem>>, %arg9: memref<1x128xf32, #tpu.memory_space<vmem>>, %arg10: memref<256x128xf32, #tpu.memory_space<vmem>>) attributes {dimension_semantics = [#tpu.dimension_semantics<parallel>], iteration_bounds = array<i64: 2>, scalar_prefetch = 0 : i64, scratch_operands = 0 : i64, tpu.core_type = #tpu.core_type<tc>, window_params = [{transform_indices = @transform_0, window_bounds = array<i64: 256, 32>}, {pipeline_mode = #tpu.pipeline_mode<synchronous>, transform_indices = @transform_1, window_bounds = array<i64: 32, 256>}, {pipeline_mode = #tpu.pipeline_mode<synchronous>, transform_indices = @transform_2, window_bounds = array<i64: 1, 256>}, {pipeline_mode = #tpu.pipeline_mode<synchronous>, transform_indices = @transform_3, window_bounds = array<i64: 256, 256>}, {pipeline_mode = #tpu.pipeline_mode<synchronous>, transform_indices = @transform_4, window_bounds = array<i64: 1, 256>}, {pipeline_mode = #tpu.pipeline_mode<synchronous>, transform_indices = @transform_5, window_bounds = array<i64: 256, 256>}, {pipeline_mode = #tpu.pipeline_mode<synchronous>, transform_indices = @transform_6, window_bounds = array<i64: 1, 256>}, {pipeline_mode = #tpu.pipeline_mode<synchronous>, transform_indices = @transform_7, window_bounds = array<i64: 256, 128>}, {pipeline_mode = #tpu.pipeline_mode<synchronous>, transform_indices = @transform_8, window_bounds = array<i64: 1, 128>}, {transform_indices = @transform_9, window_bounds = array<i64: 256, 128>}]} {
    %c0 = arith.constant 0 : index
    %c0_0 = arith.constant 0 : index
    %0 = vector.load %arg1[%c0, %c0_0] : memref<256x32xf32, #tpu.memory_space<vmem>>, vector<256x32xf32>
    %1 = arith.truncf %0 : vector<256x32xf32> to vector<256x32xbf16>
    %c0_1 = arith.constant 0 : index
    %c0_2 = arith.constant 0 : index
    %2 = vector.load %arg2[%c0_1, %c0_2] : memref<32x256xbf16, #tpu.memory_space<vmem>>, vector<32x256xbf16>
    %cst = arith.constant dense<0.000000e+00> : vector<256x256xf32>
    %3 = tpu.matmul %1, %2, %cst {dimension_numbers = #tpu.dot_dimension_numbers<[1], [0], [0], [1], [0, 0, 1, 1], [], []>} : vector<256x32xbf16>, vector<32x256xbf16>, vector<256x256xf32> -> vector<256x256xf32>
    %c0_3 = arith.constant 0 : index
    %c0_4 = arith.constant 0 : index
    %4 = vector.load %arg3[%c0_3, %c0_4] : memref<1x256xf32, #tpu.memory_space<vmem>>, vector<1x256xf32>
    %5 = vector.broadcast %4 : vector<1x256xf32> to vector<256x256xf32>
    %6 = arith.addf %3, %5 : vector<256x256xf32>
    %7 = math.tanh %6 : vector<256x256xf32>
    %8 = arith.truncf %7 : vector<256x256xf32> to vector<256x256xbf16>
    %c0_5 = arith.constant 0 : index
    %c0_6 = arith.constant 0 : index
    %9 = vector.load %arg4[%c0_5, %c0_6] : memref<256x256xbf16, #tpu.memory_space<vmem>>, vector<256x256xbf16>
    %cst_7 = arith.constant dense<0.000000e+00> : vector<256x256xf32>
    %10 = tpu.matmul %8, %9, %cst_7 {dimension_numbers = #tpu.dot_dimension_numbers<[1], [0], [0], [1], [0, 0, 1, 1], [], []>} : vector<256x256xbf16>, vector<256x256xbf16>, vector<256x256xf32> -> vector<256x256xf32>
    %c0_8 = arith.constant 0 : index
    %c0_9 = arith.constant 0 : index
    %11 = vector.load %arg5[%c0_8, %c0_9] : memref<1x256xf32, #tpu.memory_space<vmem>>, vector<1x256xf32>
    %12 = vector.broadcast %11 : vector<1x256xf32> to vector<256x256xf32>
    %13 = arith.addf %10, %12 : vector<256x256xf32>
    %14 = math.tanh %13 : vector<256x256xf32>
    %15 = arith.truncf %14 : vector<256x256xf32> to vector<256x256xbf16>
    %c0_10 = arith.constant 0 : index
    %c0_11 = arith.constant 0 : index
    %16 = vector.load %arg6[%c0_10, %c0_11] : memref<256x256xbf16, #tpu.memory_space<vmem>>, vector<256x256xbf16>
    %cst_12 = arith.constant dense<0.000000e+00> : vector<256x256xf32>
    %17 = tpu.matmul %15, %16, %cst_12 {dimension_numbers = #tpu.dot_dimension_numbers<[1], [0], [0], [1], [0, 0, 1, 1], [], []>} : vector<256x256xbf16>, vector<256x256xbf16>, vector<256x256xf32> -> vector<256x256xf32>
    %c0_13 = arith.constant 0 : index
    %c0_14 = arith.constant 0 : index
    %18 = vector.load %arg7[%c0_13, %c0_14] : memref<1x256xf32, #tpu.memory_space<vmem>>, vector<1x256xf32>
    %19 = vector.broadcast %18 : vector<1x256xf32> to vector<256x256xf32>
    %20 = arith.addf %17, %19 : vector<256x256xf32>
    %21 = math.tanh %20 : vector<256x256xf32>
    %22 = arith.truncf %21 : vector<256x256xf32> to vector<256x256xbf16>
    %c0_15 = arith.constant 0 : index
    %c0_16 = arith.constant 0 : index
    %23 = vector.load %arg8[%c0_15, %c0_16] : memref<256x128xbf16, #tpu.memory_space<vmem>>, vector<256x128xbf16>
    %cst_17 = arith.constant dense<0.000000e+00> : vector<256x128xf32>
    %24 = tpu.matmul %22, %23, %cst_17 {dimension_numbers = #tpu.dot_dimension_numbers<[1], [0], [0], [1], [0, 0, 1, 1], [], []>} : vector<256x256xbf16>, vector<256x128xbf16>, vector<256x128xf32> -> vector<256x128xf32>
    %c0_18 = arith.constant 0 : index
    %c0_19 = arith.constant 0 : index
    %25 = vector.load %arg9[%c0_18, %c0_19] : memref<1x128xf32, #tpu.memory_space<vmem>>, vector<1x128xf32>
    %26 = vector.broadcast %25 : vector<1x128xf32> to vector<256x128xf32>
    %27 = arith.addf %24, %26 : vector<256x128xf32>
    %c0_20 = arith.constant 0 : index
    %c0_21 = arith.constant 0 : index
    %28 = vector.load %arg10[%c0_20, %c0_21] : memref<256x128xf32, #tpu.memory_space<vmem>>, vector<256x128xf32>
    tpu.vector_store %arg10[%c0_20, %c0_21], %27 {strides = array<i32>} : memref<256x128xf32, #tpu.memory_space<vmem>>, vector<256x128xf32>,
    return
  }
  func.func @transform_0(%arg0: i32) -> (i32, i32) {
    %c0_i32 = arith.constant 0 : i32
    %c0_i32_0 = arith.constant 0 : i32
    return %arg0, %c0_i32 : i32, i32
  }
  func.func @transform_1(%arg0: i32) -> (i32, i32) {
    %c0_i32 = arith.constant 0 : i32
    %c0_i32_0 = arith.constant 0 : i32
    %c0_i32_1 = arith.constant 0 : i32
    return %c0_i32, %c0_i32_0 : i32, i32
  }
  func.func @transform_2(%arg0: i32) -> (i32, i32) {
    %c0_i32 = arith.constant 0 : i32
    %c0_i32_0 = arith.constant 0 : i32
    %c0_i32_1 = arith.constant 0 : i32
    return %c0_i32, %c0_i32_0 : i32, i32
  }
  func.func @transform_3(%arg0: i32) -> (i32, i32) {
    %c0_i32 = arith.constant 0 : i32
    %c0_i32_0 = arith.constant 0 : i32
    %c0_i32_1 = arith.constant 0 : i32
    return %c0_i32, %c0_i32_0 : i32, i32
  }
  func.func @transform_4(%arg0: i32) -> (i32, i32) {
    %c0_i32 = arith.constant 0 : i32
    %c0_i32_0 = arith.constant 0 : i32
    %c0_i32_1 = arith.constant 0 : i32
    return %c0_i32, %c0_i32_0 : i32, i32
  }
  func.func @transform_5(%arg0: i32) -> (i32, i32) {
    %c0_i32 = arith.constant 0 : i32
    %c0_i32_0 = arith.constant 0 : i32
    %c0_i32_1 = arith.constant 0 : i32
    return %c0_i32, %c0_i32_0 : i32, i32
  }
  func.func @transform_6(%arg0: i32) -> (i32, i32) {
    %c0_i32 = arith.constant 0 : i32
    %c0_i32_0 = arith.constant 0 : i32
    %c0_i32_1 = arith.constant 0 : i32
    return %c0_i32, %c0_i32_0 : i32, i32
  }
  func.func @transform_7(%arg0: i32) -> (i32, i32) {
    %c0_i32 = arith.constant 0 : i32
    %c0_i32_0 = arith.constant 0 : i32
    %c0_i32_1 = arith.constant 0 : i32
    return %c0_i32, %c0_i32_0 : i32, i32
  }
  func.func @transform_8(%arg0: i32) -> (i32, i32) {
    %c0_i32 = arith.constant 0 : i32
    %c0_i32_0 = arith.constant 0 : i32
    %c0_i32_1 = arith.constant 0 : i32
    return %c0_i32, %c0_i32_0 : i32, i32
  }
  func.func @transform_9(%arg0: i32) -> (i32, i32) {
    %c0_i32 = arith.constant 0 : i32
    %c0_i32_0 = arith.constant 0 : i32
    return %arg0, %c0_i32 : i32, i32
  }
}

</mosaic_0001>

<llo_original>
// kernel: tpu_custom_call.1
$region0: #{tpu_custom_call.1}
  #allocation0 [shape = 'u32[]', space=smem, size = 0x4, offset = 0x4, fixed_abs, tag = 'smem constant byte address 0x4 - core index']
  #allocation1 [shape = 'u32[144,128]{1,0:T(1,128)}', space=vmem, size = 0x12000, scoped, tag = 'internal scratch']
  %s0 = inlined_call_operand.vmem [shape: f32[512,32], index: 0, kind: input, shape index: {}]
  %s1 = inlined_call_operand.hbm [shape: bf16[32,256], index: 1, kind: input, shape index: {}]
  %s2 = inlined_call_operand.vmem [shape: f32[1,256], index: 2, kind: input, shape index: {}]
  %s3 = inlined_call_operand.vmem [shape: bf16[256,256], index: 3, kind: input, shape index: {}]
  %s4 = inlined_call_operand.vmem [shape: f32[1,256], index: 4, kind: input, shape index: {}]
  %s5 = inlined_call_operand.vmem [shape: bf16[256,256], index: 5, kind: input, shape index: {}]
  %s6 = inlined_call_operand.vmem [shape: f32[1,256], index: 6, kind: input, shape index: {}]
  %s7 = inlined_call_operand.vmem [shape: bf16[256,128], index: 7, kind: input, shape index: {}]
  %s8 = inlined_call_operand.vmem [shape: f32[1,128], index: 8, kind: input, shape index: {}]
  %s9 = inlined_call_operand.hbm [shape: f32[512,128], index: 9, kind: output, shape index: {}]
  %s10 = sld [smem:[#allocation0]]
  $region73: #{tpu_custom_call.1} parent=0
    _
  %s12 = ssub.s32 1, %s10
  %s13 = scalar_select 0, %s12, %s10
  $region1: #{tpu_custom_call.1} parent=0
    #allocation2 [shape = 'u8[16384]{0}', space=vmem, size = 0x4000, scoped, tag = 'input window, operand 1, single buffered']
    #allocation3 [shape = 's32[2]{0}', space=sflag, size = 0x8, scoped, tag = 'scoped memory for tpu_custom_call.1']
    #allocation4 [shape = 's32[2]{0}', space=sflag, size = 0x8, scoped, tag = 'scoped memory for tpu_custom_call.1']
    #allocation5 [shape = 'u8[262144]{0}', space=vmem, size = 0x40000, scoped, tag = 'output window, operand 0']
    %14 = vsyncpa [#allocation3], 0
    %15 = vsyncpa [#allocation4], 0
    %s16 = scalar_lea.sflag [#allocation4], 1
    %17 = vsyncpa %s16, 0
    loop: start=0, step=1, limit=4
    $region2: #{tpu_custom_call.1} parent=1 // loop_pre_header
      _
    $region3: #{tpu_custom_call.1} parent=1 // loop_header
      %s19 = sphi 0, %s23
      %p20 = scmp.ge.s32.totalorder %s19, 4
      %s29 = sphi 0, %s31
      %s32 = sphi 0, %s29
      %s33 = sphi 0, %s32
      %s49 = sphi 0, %s33
      %s53 = sphi 0, %s53
      %s55 = sphi 0, %s53
      %s56 = sphi 0, %s55
      %s70 = sphi 0, %s56
      %s74 = sphi 0, %s74
      %s76 = sphi 0, %s74
      %s77 = sphi 0, %s76
      %s91 = sphi 0, %s77
      %s95 = sphi 0, %s95
      %s97 = sphi 0, %s95
      %s98 = sphi 0, %s97
      %s112 = sphi 0, %s98
      %s116 = sphi 0, %s116
      %s118 = sphi 0, %s116
      %s119 = sphi 0, %s118
      %s133 = sphi 0, %s119
      %s137 = sphi 0, %s137
      %s139 = sphi 0, %s137
      %s140 = sphi 0, %s139
      %s154 = sphi 0, %s140
      %s158 = sphi 0, %s158
      %s160 = sphi 0, %s158
      %s161 = sphi 0, %s160
      %s175 = sphi 0, %s161
      %s179 = sphi 0, %s179
      %s181 = sphi 0, %s179
      %s182 = sphi 0, %s181
      %s196 = sphi 0, %s182
      %s200 = sphi 0, %s200
      %s202 = sphi 0, %s200
      %s203 = sphi 0, %s202
      %s217 = sphi 0, %s203
      %s223 = sphi 0, %s225
      %s226 = sphi 0, %s223
      %s227 = sphi 0, %s226
      %s243 = sphi 0, %s227
    $region4: #{tpu_custom_call.1} parent=1 // loop_header_branch
      %22 = sbr.rel (%p20) target = $region8
    $region5: #{tpu_custom_call.1} parent=1 // loop_body
      %s24 = ssub.s32 %s19, 1
      %s25 = ssub.s32 %s19, 2
      %s26 = sadd.s32 %s19, 1
      %s27 = ssub.s32 %s19, %s26
      %p28 = scmp.eq.s32.totalorder %s27, 0
      %s30 = sadd.s32 %s29, 1
      %s31 = scalar_select %p28, %s29, %s30
      %p34 = pneg %p28
      %p35 = scmp.eq.s32.totalorder %s19, 1
      %p36 = por %p34, %p35
      %p37 = scmp.ne.s32.totalorder %s29, %s32
      %p38 = scmp.eq.s32.totalorder %s19, 0
      %p39 = por %p37, %p38
      %p40 = scmp.ne.s32.totalorder %s29, %s32
      %p41 = scmp.eq.s32.totalorder %s24, 1
      %p42 = por %p40, %p41
      %p43 = scmp.ne.s32.totalorder %s32, %s33
      %p44 = scmp.eq.s32.totalorder %s24, 0
      %p45 = por %p43, %p44
      %p46 = scmp.ne.s32.totalorder %s32, %s33
      %p47 = scmp.eq.s32.totalorder %s25, 1
      %p48 = por %p46, %p47
      %p50 = scmp.ne.s32.totalorder %s33, %s49
      %p51 = scmp.eq.s32.totalorder %s25, 0
      %p52 = por %p50, %p51
      %s54 = sadd.s32 %s53, 1
      %p57 = scmp.eq.s32.totalorder %s19, 1
      %p58 = scmp.ne.s32.totalorder %s53, %s55
      %p59 = scmp.eq.s32.totalorder %s19, 0
      %p60 = por %p58, %p59
      %p61 = scmp.ne.s32.totalorder %s53, %s55
      %p62 = scmp.eq.s32.totalorder %s24, 1
      %p63 = por %p61, %p62
      %p64 = scmp.ne.s32.totalorder %s55, %s56
      %p65 = scmp.eq.s32.totalorder %s24, 0
      %p66 = por %p64, %p65
      %p67 = scmp.ne.s32.totalorder %s55, %s56
      %p68 = scmp.eq.s32.totalorder %s25, 1
      %p69 = por %p67, %p68
      %p71 = scmp.ne.s32.totalorder %s56, %s70
      %p72 = scmp.eq.s32.totalorder %s25, 0
      %p73 = por %p71, %p72
      %s75 = sadd.s32 %s74, 1
      %p78 = scmp.eq.s32.totalorder %s19, 1
      %p79 = scmp.ne.s32.totalorder %s74, %s76
      %p80 = scmp.eq.s32.totalorder %s19, 0
      %p81 = por %p79, %p80
      %p82 = scmp.ne.s32.totalorder %s74, %s76
      %p83 = scmp.eq.s32.totalorder %s24, 1
      %p84 = por %p82, %p83
      %p85 = scmp.ne.s32.totalorder %s76, %s77
      %p86 = scmp.eq.s32.totalorder %s24, 0
      %p87 = por %p85, %p86
      %p88 = scmp.ne.s32.totalorder %s76, %s77
      %p89 = scmp.eq.s32.totalorder %s25, 1
      %p90 = por %p88, %p89
      %p92 = scmp.ne.s32.totalorder %s77, %s91
      %p93 = scmp.eq.s32.totalorder %s25, 0
      %p94 = por %p92, %p93
      %s96 = sadd.s32 %s95, 1
      %p99 = scmp.eq.s32.totalorder %s19, 1
      %p100 = scmp.ne.s32.totalorder %s95, %s97
      %p101 = scmp.eq.s32.totalorder %s19, 0
      %p102 = por %p100, %p101
      %p103 = scmp.ne.s32.totalorder %s95, %s97
      %p104 = scmp.eq.s32.totalorder %s24, 1
      %p105 = por %p103, %p104
      %p106 = scmp.ne.s32.totalorder %s97, %s98
      %p107 = scmp.eq.s32.totalorder %s24, 0
      %p108 = por %p106, %p107
      %p109 = scmp.ne.s32.totalorder %s97, %s98
      %p110 = scmp.eq.s32.totalorder %s25, 1
      %p111 = por %p109, %p110
      %p113 = scmp.ne.s32.totalorder %s98, %s112
      %p114 = scmp.eq.s32.totalorder %s25, 0
      %p115 = por %p113, %p114
      %s117 = sadd.s32 %s116, 1
      %p120 = scmp.eq.s32.totalorder %s19, 1
      %p121 = scmp.ne.s32.totalorder %s116, %s118
      %p122 = scmp.eq.s32.totalorder %s19, 0
      %p123 = por %p121, %p122
      %p124 = scmp.ne.s32.totalorder %s116, %s118
      %p125 = scmp.eq.s32.totalorder %s24, 1
      %p126 = por %p124, %p125
      %p127 = scmp.ne.s32.totalorder %s118, %s119
      %p128 = scmp.eq.s32.totalorder %s24, 0
      %p129 = por %p127, %p128
      %p130 = scmp.ne.s32.totalorder %s118, %s119
      %p131 = scmp.eq.s32.totalorder %s25, 1
      %p132 = por %p130, %p131
      %p134 = scmp.ne.s32.totalorder %s119, %s133
      %p135 = scmp.eq.s32.totalorder %s25, 0
      %p136 = por %p134, %p135
      %s138 = sadd.s32 %s137, 1
      %p141 = scmp.eq.s32.totalorder %s19, 1
      %p142 = scmp.ne.s32.totalorder %s137, %s139
      %p143 = scmp.eq.s32.totalorder %s19, 0
      %p144 = por %p142, %p143
      %p145 = scmp.ne.s32.totalorder %s137, %s139
      %p146 = scmp.eq.s32.totalorder %s24, 1
      %p147 = por %p145, %p146
      %p148 = scmp.ne.s32.totalorder %s139, %s140
      %p149 = scmp.eq.s32.totalorder %s24, 0
      %p150 = por %p148, %p149
      %p151 = scmp.ne.s32.totalorder %s139, %s140
      %p152 = scmp.eq.s32.totalorder %s25, 1
      %p153 = por %p151, %p152
      %p155 = scmp.ne.s32.totalorder %s140, %s154
      %p156 = scmp.eq.s32.totalorder %s25, 0
      %p157 = por %p155, %p156
      %s159 = sadd.s32 %s158, 1
      %p162 = scmp.eq.s32.totalorder %s19, 1
      %p163 = scmp.ne.s32.totalorder %s158, %s160
      %p164 = scmp.eq.s32.totalorder %s19, 0
      %p165 = por %p163, %p164
      %p166 = scmp.ne.s32.totalorder %s158, %s160
      %p167 = scmp.eq.s32.totalorder %s24, 1
      %p168 = por %p166, %p167
      %p169 = scmp.ne.s32.totalorder %s160, %s161
      %p170 = scmp.eq.s32.totalorder %s24, 0
      %p171 = por %p169, %p170
      %p172 = scmp.ne.s32.totalorder %s160, %s161
      %p173 = scmp.eq.s32.totalorder %s25, 1
      %p174 = por %p172, %p173
      %p176 = scmp.ne.s32.totalorder %s161, %s175
      %p177 = scmp.eq.s32.totalorder %s25, 0
      %p178 = por %p176, %p177
      %s180 = sadd.s32 %s179, 1
      %p183 = scmp.eq.s32.totalorder %s19, 1
      %p184 = scmp.ne.s32.totalorder %s179, %s181
      %p185 = scmp.eq.s32.totalorder %s19, 0
      %p186 = por %p184, %p185
      %p187 = scmp.ne.s32.totalorder %s179, %s181
      %p188 = scmp.eq.s32.totalorder %s24, 1
      %p189 = por %p187, %p188
      %p190 = scmp.ne.s32.totalorder %s181, %s182
      %p191 = scmp.eq.s32.totalorder %s24, 0
      %p192 = por %p190, %p191
      %p193 = scmp.ne.s32.totalorder %s181, %s182
      %p194 = scmp.eq.s32.totalorder %s25, 1
      %p195 = por %p193, %p194
      %p197 = scmp.ne.s32.totalorder %s182, %s196
      %p198 = scmp.eq.s32.totalorder %s25, 0
      %p199 = por %p197, %p198
      %s201 = sadd.s32 %s200, 1
      %p204 = scmp.eq.s32.totalorder %s19, 1
      %p205 = scmp.ne.s32.totalorder %s200, %s202
      %p206 = scmp.eq.s32.totalorder %s19, 0
      %p207 = por %p205, %p206
      %p208 = scmp.ne.s32.totalorder %s200, %s202
      %p209 = scmp.eq.s32.totalorder %s24, 1
      %p210 = por %p208, %p209
      %p211 = scmp.ne.s32.totalorder %s202, %s203
      %p212 = scmp.eq.s32.totalorder %s24, 0
      %p213 = por %p211, %p212
      %p214 = scmp.ne.s32.totalorder %s202, %s203
      %p215 = scmp.eq.s32.totalorder %s25, 1
      %p216 = por %p214, %p215
      %p218 = scmp.ne.s32.totalorder %s203, %s217
      %p219 = scmp.eq.s32.totalorder %s25, 0
      %p220 = por %p218, %p219
      %s221 = ssub.s32 %s19, %s26
      %p222 = scmp.eq.s32.totalorder %s221, 0
      %s224 = sadd.s32 %s223, 1
      %s225 = scalar_select %p222, %s223, %s224
      %p228 = pneg %p222
      %p229 = scmp.eq.s32.totalorder %s19, 1
      %p230 = por %p228, %p229
      %p231 = scmp.ne.s32.totalorder %s223, %s226
      %p232 = scmp.eq.s32.totalorder %s19, 0
      %p233 = por %p231, %p232
      %p234 = scmp.ne.s32.totalorder %s223, %s226
      %p235 = scmp.eq.s32.totalorder %s24, 1
      %p236 = por %p234, %p235
      %p237 = scmp.ne.s32.totalorder %s226, %s227
      %p238 = scmp.eq.s32.totalorder %s24, 0
      %p239 = por %p237, %p238
      %p240 = scmp.ne.s32.totalorder %s226, %s227
      %p241 = scmp.eq.s32.totalorder %s25, 1
      %p242 = por %p240, %p241
      %p244 = scmp.ne.s32.totalorder %s227, %s243
      %p245 = scmp.eq.s32.totalorder %s25, 0
      %p246 = por %p244, %p245
      %p247 = scmp.le.s32.totalorder 1, %s19
      %p248 = scmp.lt.s32.totalorder %s19, 3
      %p249 = pnand %p247, %p248
      %p250 = pneg %p249
      // Predicated region
      $region9: #{tpu_custom_call.1} parent=5 // pred_check
        _
      $region10: #{tpu_custom_call.1} parent=5 // pred_check_branch
        %252 = sbr.rel (%p249) target = $region12
      $region11: #{tpu_custom_call.1} parent=5 // pred_region
        %s253 = ssub.s32 %s19, 1
        // Predicated region
        $region13: #{tpu_custom_call.1} parent=11 // pred_check
          %p254 = pneg %p66
        $region14: #{tpu_custom_call.1} parent=11 // pred_check_branch
          %256 = sbr.rel (%p254) target = $region16
        $region15: #{tpu_custom_call.1} parent=11 // pred_region
          %s258 = ssub.s32 512, 512
          %259 = vsyncadd [#allocation3], %s258
          %s260 = sshll.u32 [#allocation2], 4
          %s261 = int_to_ptr.vmem [resolvable:$true] %s260
          %266 = dma.hbm_to_vmem [thread:$0]  %s1, 512, %s261, [#allocation3], 128, 128, 8
        $region16: #{tpu_custom_call.1} parent=11 // pred_fallthru
          _
        // Predicated region
        $region17: #{tpu_custom_call.1} parent=11 // pred_check
          %p267 = pneg %p87
        $region18: #{tpu_custom_call.1} parent=11 // pred_check_branch
          %269 = sbr.rel (%p267) target = $region20
        $region19: #{tpu_custom_call.1} parent=11 // pred_region
          _
        $region20: #{tpu_custom_call.1} parent=11 // pred_fallthru
          _
        // Predicated region
        $region21: #{tpu_custom_call.1} parent=11 // pred_check
          %p270 = pneg %p108
        $region22: #{tpu_custom_call.1} parent=11 // pred_check_branch
          %272 = sbr.rel (%p270) target = $region24
        $region23: #{tpu_custom_call.1} parent=11 // pred_region
          _
        $region24: #{tpu_custom_call.1} parent=11 // pred_fallthru
          _
        // Predicated region
        $region25: #{tpu_custom_call.1} parent=11 // pred_check
          %p273 = pneg %p129
        $region26: #{tpu_custom_call.1} parent=11 // pred_check_branch
          %275 = sbr.rel (%p273) target = $region28
        $region27: #{tpu_custom_call.1} parent=11 // pred_region
          _
        $region28: #{tpu_custom_call.1} parent=11 // pred_fallthru
          _
        // Predicated region
        $region29: #{tpu_custom_call.1} parent=11 // pred_check
          %p276 = pneg %p150
        $region30: #{tpu_custom_call.1} parent=11 // pred_check_branch
          %278 = sbr.rel (%p276) target = $region32
        $region31: #{tpu_custom_call.1} parent=11 // pred_region
          _
        $region32: #{tpu_custom_call.1} parent=11 // pred_fallthru
          _
        // Predicated region
        $region33: #{tpu_custom_call.1} parent=11 // pred_check
          %p279 = pneg %p171
        $region34: #{tpu_custom_call.1} parent=11 // pred_check_branch
          %281 = sbr.rel (%p279) target = $region36
        $region35: #{tpu_custom_call.1} parent=11 // pred_region
          _
        $region36: #{tpu_custom_call.1} parent=11 // pred_fallthru
          _
        // Predicated region
        $region37: #{tpu_custom_call.1} parent=11 // pred_check
          %p282 = pneg %p192
        $region38: #{tpu_custom_call.1} parent=11 // pred_check_branch
          %284 = sbr.rel (%p282) target = $region40
        $region39: #{tpu_custom_call.1} parent=11 // pred_region
          _
        $region40: #{tpu_custom_call.1} parent=11 // pred_fallthru
          _
        // Predicated region
        $region41: #{tpu_custom_call.1} parent=11 // pred_check
          %p285 = pneg %p213
        $region42: #{tpu_custom_call.1} parent=11 // pred_check_branch
          %287 = sbr.rel (%p285) target = $region44
        $region43: #{tpu_custom_call.1} parent=11 // pred_region
          _
        $region44: #{tpu_custom_call.1} parent=11 // pred_fallthru
          _
      $region12: #{tpu_custom_call.1} parent=5 // pred_fallthru
        _
      %p288 = scmp.lt.s32.totalorder %s19, 2
      // Predicated region
      $region45: #{tpu_custom_call.1} parent=5 // pred_check
        %p289 = pneg %p288
      $region46: #{tpu_custom_call.1} parent=5 // pred_check_branch
        %291 = sbr.rel (%p289) target = $region48
      $region47: #{tpu_custom_call.1} parent=5 // pred_region
        // Predicated region
        $region49: #{tpu_custom_call.1} parent=47 // pred_check
          %p292 = pneg %p39
        $region50: #{tpu_custom_call.1} parent=47 // pred_check_branch
          %294 = sbr.rel (%p292) target = $region52
        $region51: #{tpu_custom_call.1} parent=47 // pred_region
          %s295 = smul.u32 32, %s19
          %p296 = scmp.lt.s32.totalorder %s295, 63
          %s297 = scalar_select %p296, %s295, 63
          %s298 = smul.addr %s297, 8
          %s299 = scalar_lea.vmem %s0, %s298
          %s300 = smul.u32 32, %s19
        $region52: #{tpu_custom_call.1} parent=47 // pred_fallthru
          _
      $region48: #{tpu_custom_call.1} parent=5 // pred_fallthru
        _
      %p301 = scmp.le.s32.totalorder 1, %s19
      %p302 = scmp.lt.s32.totalorder %s19, 3
      %p303 = pnand %p301, %p302
      %p304 = pneg %p303
      // Predicated region
      $region53: #{tpu_custom_call.1} parent=5 // pred_check
        _
      $region54: #{tpu_custom_call.1} parent=5 // pred_check_branch
        %306 = sbr.rel (%p303) target = $region56
      $region55: #{tpu_custom_call.1} parent=5 // pred_region
        %s307 = ssub.s32 %s19, 1
        // Predicated region
        $region57: #{tpu_custom_call.1} parent=55 // pred_check
          %p308 = pneg %p66
        $region58: #{tpu_custom_call.1} parent=55 // pred_check_branch
          %310 = sbr.rel (%p308) target = $region60
        $region59: #{tpu_custom_call.1} parent=55 // pred_region
          %311 = dma.done [#allocation3], 512
        $region60: #{tpu_custom_call.1} parent=55 // pred_fallthru
          _
        %s312 = smul.u32 32, %s24
        %p313 = scmp.lt.s32.totalorder %s312, 63
        %s314 = scalar_select %p313, %s312, 63
        %s315 = smul.addr %s314, 8
        %s316 = scalar_lea.vmem %s0, %s315
        %p317 = pneg %p45
        %p318 = pneg %p42
        %p319 = pneg %p66
        %p320 = pneg %p63
        %p321 = pneg %p87
        %p322 = pneg %p84
        %p323 = pneg %p108
        %p324 = pneg %p105
        %p325 = pneg %p129
        %p326 = pneg %p126
        %p327 = pneg %p150
        %p328 = pneg %p147
        %p329 = pneg %p171
        %p330 = pneg %p168
        %p331 = pneg %p192
        %p332 = pneg %p189
        %p333 = pneg %p213
        %p334 = pneg %p210
        %p335 = pneg %p239
        %p336 = pneg %p236
        %s337 = sand.u32 %s226, 1
        %s338 = scalar_lea.sflag [#allocation4], %s337
        %s339 = sand.u32 %s226, 1
        %s340 = smul.addr %s339, 256
        %s341 = scalar_lea.vmem [#allocation5], %s340
        %s342 = smul.u32 32, %s24
        %p343 = scmp.lt.s32.totalorder %s342, 63
        %s344 = scalar_select %p343, %s342, 63
        %s345 = smul.addr %s344, 8
        %s346 = scalar_lea.vmem %s0, %s345
        %s347 = smul.u32 32, %s24
        %s348 = smul.u32 32, %s24
        %v350 = vld [vmem:[%s346] sm:$0xff]
        %v351 = vld [vmem:[%s346 + $0x8] sm:$0xff]
        %v352 = vld [vmem:[%s346 + $0x10] sm:$0xff]
        %v353 = vld [vmem:[%s346 + $0x18] sm:$0xff]
        %v354 = vld [vmem:[%s346 + $0x20] sm:$0xff]
        %v355 = vld [vmem:[%s346 + $0x28] sm:$0xff]
        %v356 = vld [vmem:[%s346 + $0x30] sm:$0xff]
        %v357 = vld [vmem:[%s346 + $0x38] sm:$0xff]
        %v358 = vld [vmem:[%s346 + $0x40] sm:$0xff]
        %v359 = vld [vmem:[%s346 + $0x48] sm:$0xff]
        %v360 = vld [vmem:[%s346 + $0x50] sm:$0xff]
        %v361 = vld [vmem:[%s346 + $0x58] sm:$0xff]
        %v362 = vld [vmem:[%s346 + $0x60] sm:$0xff]
        %v363 = vld [vmem:[%s346 + $0x68] sm:$0xff]
        %v364 = vld [vmem:[%s346 + $0x70] sm:$0xff]
        %v365 = vld [vmem:[%s346 + $0x78] sm:$0xff]
        %v366 = vld [vmem:[%s346 + $0x80] sm:$0xff]
        %v367 = vld [vmem:[%s346 + $0x88] sm:$0xff]
        %v368 = vld [vmem:[%s346 + $0x90] sm:$0xff]
        %v369 = vld [vmem:[%s346 + $0x98] sm:$0xff]
        %v370 = vld [vmem:[%s346 + $0xa0] sm:$0xff]
        %v371 = vld [vmem:[%s346 + $0xa8] sm:$0xff]
        %v372 = vld [vmem:[%s346 + $0xb0] sm:$0xff]
        %v373 = vld [vmem:[%s346 + $0xb8] sm:$0xff]
        %v374 = vld [vmem:[%s346 + $0xc0] sm:$0xff]
        %v375 = vld [vmem:[%s346 + $0xc8] sm:$0xff]
        %v376 = vld [vmem:[%s346 + $0xd0] sm:$0xff]
        %v377 = vld [vmem:[%s346 + $0xd8] sm:$0xff]
        %v378 = vld [vmem:[%s346 + $0xe0] sm:$0xff]
        %v379 = vld [vmem:[%s346 + $0xe8] sm:$0xff]
        %v380 = vld [vmem:[%s346 + $0xf0] sm:$0xff]
        %v381 = vld [vmem:[%s346 + $0xf8] sm:$0xff]
        %v382 = vpack.c.bf16 %v351, %v350
        %v383 = vpack.c.bf16 %v353, %v352
        %v384 = vpack.c.bf16 %v355, %v354
        %v385 = vpack.c.bf16 %v357, %v356
        %v386 = vpack.c.bf16 %v359, %v358
        %v387 = vpack.c.bf16 %v361, %v360
        %v388 = vpack.c.bf16 %v363, %v362
        %v389 = vpack.c.bf16 %v365, %v364
        %v390 = vpack.c.bf16 %v367, %v366
        %v391 = vpack.c.bf16 %v369, %v368
        %v392 = vpack.c.bf16 %v371, %v370
        %v393 = vpack.c.bf16 %v373, %v372
        %v394 = vpack.c.bf16 %v375, %v374
        %v395 = vpack.c.bf16 %v377, %v376
        %v396 = vpack.c.bf16 %v379, %v378
        %v397 = vpack.c.bf16 %v381, %v380
        %v398 = vld [vmem:[#allocation2] sm:$0xff]
        %v399 = vld [vmem:[#allocation2 + $0x8] sm:$0xff]
        %v400 = vld [vmem:[#allocation2 + $0x10] sm:$0xff]
        %v401 = vld [vmem:[#allocation2 + $0x18] sm:$0xff]
        %v402 = vld [vmem:[%s2] sm:$0x3]
        %v404 = vlaneseq
        %v405 = vshrl.u32 %v404, 7
        %v406 = vsub.s32 0, %v405
        %v407 = vrot.slane %v402, %v406
        %v408 = vlaneseq
        %v409 = vshrl.u32 %v408, 7
        %v410 = vsub.s32 1, %v409
        %v411 = vrot.slane %v402, %v410
        %v418 = vunpack.c.l.b16 %v398
        %v419 = vunpack.c.h.b16 %v398
        %v420 = vunpack.c.l.b16 %v399
        %v421 = vunpack.c.h.b16 %v399
        %v422 = vunpack.c.l.b16 %v400
        %v423 = vunpack.c.h.b16 %v400
        %v424 = vunpack.c.l.b16 %v401
        %v425 = vunpack.c.h.b16 %v401
        %v426 = vpack.c.b16 %v420, %v418
        %v427 = vpack.c.b16 %v421, %v419
        %v428 = vpack.c.b16 %v424, %v422
        %v429 = vpack.c.b16 %v425, %v423
        %vm434 = vcmask 261120
        %v436 = vsel %vm434, %v382, 0
        %v439 = vsel %vm434, %v383, 0
        %v442 = vsel %vm434, %v384, 0
        %v445 = vsel %vm434, %v385, 0
        %v448 = vsel %vm434, %v386, 0
        %v451 = vsel %vm434, %v387, 0
        %v454 = vsel %vm434, %v388, 0
        %v457 = vsel %vm434, %v389, 0
        %v460 = vsel %vm434, %v390, 0
        %v463 = vsel %vm434, %v391, 0
        %v466 = vsel %vm434, %v392, 0
        %v469 = vsel %vm434, %v393, 0
        %v472 = vsel %vm434, %v394, 0
        %v475 = vsel %vm434, %v395, 0
        %v478 = vsel %vm434, %v396, 0
        %v481 = vsel %vm434, %v397, 0
        %483 = vmatprep.subr.bf16.mxu0 %v427
        %484 = vmatpush1.bf16.msra.mxu0 %v426
        %485 = vmatprep.subr.bf16.mxu0 %v429
        %486 = vmatpush1.bf16.msra.mxu0 %v428
        %487 = vmatprep.subr.bf16.mxu0 0
        %488 = vmatpush1.bf16.msra.mxu0 0
        %489 = vmatprep.subr.bf16.mxu0 0
        %490 = vmatpush1.bf16.msra.mxu0 0
        %491 = vmatprep.subr.bf16.mxu0 0
        %492 = vmatpush1.bf16.msra.mxu0 0
        %493 = vmatprep.subr.bf16.mxu0 0
        %494 = vmatpush1.bf16.msra.mxu0 0
        %495 = vmatprep.subr.bf16.mxu0 0
        %496 = vmatpush1.bf16.msra.mxu0 0
        %497 = vmatprep.subr.bf16.mxu0 0
        %498 = vmatpush1.bf16.msra.mxu0 0
        %499 = vmatprep.subr.bf16.mxu0 0
        %500 = vmatpush1.bf16.msra.mxu0 0
        %501 = vmatprep.subr.bf16.mxu0 0
        %502 = vmatpush1.bf16.msra.mxu0 0
        %503 = vmatprep.subr.bf16.mxu0 0
        %504 = vmatpush1.bf16.msra.mxu0 0
        %505 = vmatprep.subr.bf16.mxu0 0
        %506 = vmatpush1.bf16.msra.mxu0 0
        %507 = vmatprep.subr.bf16.mxu0 0
        %508 = vmatpush1.bf16.msra.mxu0 0
        %509 = vmatprep.subr.bf16.mxu0 0
        %510 = vmatpush1.bf16.msra.mxu0 0
        %511 = vmatprep.subr.bf16.mxu0 0
        %512 = vmatpush1.bf16.msra.mxu0 0
        %513 = vmatprep.subr.bf16.mxu0 0
        %514 = vmatpush1.bf16.msra.mxu0 0
        %515 = vmatprep.mubr.bf16.mxu0 0
        %516 = vmatmul.mubr.bf16.gmra.mrb[0].mxu0 %v436
        %v517 = vpop.f32.mrb[0].mxu0
        %v518 = vadd.f32 %v407, %v517
        %v519 = vpop.f32.mrb[0].mxu0
        %v520 = vadd.f32 %v411, %v519
        %v521 = vpop.f32.mrb[0].mxu0
        %v522 = vadd.f32 %v407, %v521
        %v523 = vpop.f32.mrb[0].mxu0
        %v524 = vadd.f32 %v411, %v523
        %525 = vmatprep.mubr.bf16.mxu0 0
        %526 = vmatmul.mubr.bf16.gmra.mrb[0].mxu0 %v439
        %v527 = vpop.f32.mrb[0].mxu0
        %v528 = vadd.f32 %v407, %v527
        %v529 = vpop.f32.mrb[0].mxu0
        %v530 = vadd.f32 %v411, %v529
        %v531 = vpop.f32.mrb[0].mxu0
        %v532 = vadd.f32 %v407, %v531
        %v533 = vpop.f32.mrb[0].mxu0
        %v534 = vadd.f32 %v411, %v533
        %535 = vmatprep.mubr.bf16.mxu0 0
        %536 = vmatmul.mubr.bf16.gmra.mrb[0].mxu0 %v442
        %v537 = vpop.f32.mrb[0].mxu0
        %v538 = vadd.f32 %v407, %v537
        %v539 = vpop.f32.mrb[0].mxu0
        %v540 = vadd.f32 %v411, %v539
        %v541 = vpop.f32.mrb[0].mxu0
        %v542 = vadd.f32 %v407, %v541
        %v543 = vpop.f32.mrb[0].mxu0
        %v544 = vadd.f32 %v411, %v543
        %545 = vmatprep.mubr.bf16.mxu0 0
        %546 = vmatmul.mubr.bf16.gmra.mrb[0].mxu0 %v445
        %v547 = vpop.f32.mrb[0].mxu0
        %v548 = vadd.f32 %v407, %v547
        %v549 = vpop.f32.mrb[0].mxu0
        %v550 = vadd.f32 %v411, %v549
        %v551 = vpop.f32.mrb[0].mxu0
        %v552 = vadd.f32 %v407, %v551
        %v553 = vpop.f32.mrb[0].mxu0
        %v554 = vadd.f32 %v411, %v553
        %555 = vmatprep.mubr.bf16.mxu0 0
        %556 = vmatmul.mubr.bf16.gmra.mrb[0].mxu0 %v448
        %v557 = vpop.f32.mrb[0].mxu0
        %v558 = vadd.f32 %v407, %v557
        %v559 = vpop.f32.mrb[0].mxu0
        %v560 = vadd.f32 %v411, %v559
        %v561 = vpop.f32.mrb[0].mxu0
        %v562 = vadd.f32 %v407, %v561
        %v563 = vpop.f32.mrb[0].mxu0
        %v564 = vadd.f32 %v411, %v563
        %565 = vmatprep.mubr.bf16.mxu0 0
        %566 = vmatmul.mubr.bf16.gmra.mrb[0].mxu0 %v451
        %v567 = vpop.f32.mrb[0].mxu0
        %v568 = vadd.f32 %v407, %v567
        %v569 = vpop.f32.mrb[0].mxu0
        %v570 = vadd.f32 %v411, %v569
        %v571 = vpop.f32.mrb[0].mxu0
        %v572 = vadd.f32 %v407, %v571
        %v573 = vpop.f32.mrb[0].mxu0
        %v574 = vadd.f32 %v411, %v573
        %575 = vmatprep.mubr.bf16.mxu0 0
        %576 = vmatmul.mubr.bf16.gmra.mrb[0].mxu0 %v454
        %v577 = vpop.f32.mrb[0].mxu0
        %v578 = vadd.f32 %v407, %v577
        %v579 = vpop.f32.mrb[0].mxu0
        %v580 = vadd.f32 %v411, %v579
        %v581 = vpop.f32.mrb[0].mxu0
        %v582 = vadd.f32 %v407, %v581
        %v583 = vpop.f32.mrb[0].mxu0
        %v584 = vadd.f32 %v411, %v583
        %585 = vmatprep.mubr.bf16.mxu0 0
        %586 = vmatmul.mubr.bf16.gmra.mrb[0].mxu0 %v457
        %v587 = vpop.f32.mrb[0].mxu0
        %v588 = vadd.f32 %v407, %v587
        %v589 = vpop.f32.mrb[0].mxu0
        %v590 = vadd.f32 %v411, %v589
        %v591 = vpop.f32.mrb[0].mxu0
        %v592 = vadd.f32 %v407, %v591
        %v593 = vpop.f32.mrb[0].mxu0
        %v594 = vadd.f32 %v411, %v593
        %595 = vmatprep.mubr.bf16.mxu0 0
        %596 = vmatmul.mubr.bf16.gmra.mrb[0].mxu0 %v460
        %v597 = vpop.f32.mrb[0].mxu0
        %v598 = vadd.f32 %v407, %v597
        %v599 = vpop.f32.mrb[0].mxu0
        %v600 = vadd.f32 %v411, %v599
        %v601 = vpop.f32.mrb[0].mxu0
        %v602 = vadd.f32 %v407, %v601
        %v603 = vpop.f32.mrb[0].mxu0
        %v604 = vadd.f32 %v411, %v603
        %605 = vmatprep.mubr.bf16.mxu0 0
        %606 = vmatmul.mubr.bf16.gmra.mrb[0].mxu0 %v463
        %v607 = vpop.f32.mrb[0].mxu0
        %v608 = vadd.f32 %v407, %v607
        %v609 = vpop.f32.mrb[0].mxu0
        %v610 = vadd.f32 %v411, %v609
        %v611 = vpop.f32.mrb[0].mxu0
        %v612 = vadd.f32 %v407, %v611
        %v613 = vpop.f32.mrb[0].mxu0
        %v614 = vadd.f32 %v411, %v613
        %615 = vmatprep.mubr.bf16.mxu0 0
        %616 = vmatmul.mubr.bf16.gmra.mrb[0].mxu0 %v466
        %v617 = vpop.f32.mrb[0].mxu0
        %v618 = vadd.f32 %v407, %v617
        %v619 = vpop.f32.mrb[0].mxu0
        %v620 = vadd.f32 %v411, %v619
        %v621 = vpop.f32.mrb[0].mxu0
        %v622 = vadd.f32 %v407, %v621
        %v623 = vpop.f32.mrb[0].mxu0
        %v624 = vadd.f32 %v411, %v623
        %625 = vmatprep.mubr.bf16.mxu0 0
        %626 = vmatmul.mubr.bf16.gmra.mrb[0].mxu0 %v469
        %v627 = vpop.f32.mrb[0].mxu0
        %v628 = vadd.f32 %v407, %v627
        %v629 = vpop.f32.mrb[0].mxu0
        %v630 = vadd.f32 %v411, %v629
        %v631 = vpop.f32.mrb[0].mxu0
        %v632 = vadd.f32 %v407, %v631
        %v633 = vpop.f32.mrb[0].mxu0
        %v634 = vadd.f32 %v411, %v633
        %635 = vmatprep.mubr.bf16.mxu0 0
        %636 = vmatmul.mubr.bf16.gmra.mrb[0].mxu0 %v472
        %v637 = vpop.f32.mrb[0].mxu0
        %v638 = vadd.f32 %v407, %v637
        %v639 = vpop.f32.mrb[0].mxu0
        %v640 = vadd.f32 %v411, %v639
        %v641 = vpop.f32.mrb[0].mxu0
        %v642 = vadd.f32 %v407, %v641
        %v643 = vpop.f32.mrb[0].mxu0
        %v644 = vadd.f32 %v411, %v643
        %645 = vmatprep.mubr.bf16.mxu0 0
        %646 = vmatmul.mubr.bf16.gmra.mrb[0].mxu0 %v475
        %v647 = vpop.f32.mrb[0].mxu0
        %v648 = vadd.f32 %v407, %v647
        %v649 = vpop.f32.mrb[0].mxu0
        %v650 = vadd.f32 %v411, %v649
        %v651 = vpop.f32.mrb[0].mxu0
        %v652 = vadd.f32 %v407, %v651
        %v653 = vpop.f32.mrb[0].mxu0
        %v654 = vadd.f32 %v411, %v653
        %655 = vmatprep.mubr.bf16.mxu0 0
        %656 = vmatmul.mubr.bf16.gmra.mrb[0].mxu0 %v478
        %v657 = vpop.f32.mrb[0].mxu0
        %v658 = vadd.f32 %v407, %v657
        %v659 = vpop.f32.mrb[0].mxu0
        %v660 = vadd.f32 %v411, %v659
        %v661 = vpop.f32.mrb[0].mxu0
        %v662 = vadd.f32 %v407, %v661
        %v663 = vpop.f32.mrb[0].mxu0
        %v664 = vadd.f32 %v411, %v663
        %665 = vmatprep.mubr.bf16.mxu0 0
        %666 = vmatmul.mubr.bf16.gmra.mrb[0].mxu0 %v481
        %v667 = vpop.f32.mrb[0].mxu0
        %v668 = vadd.f32 %v407, %v667
        %v669 = vpop.f32.mrb[0].mxu0
        %v670 = vadd.f32 %v411, %v669
        %v671 = vpop.f32.mrb[0].mxu0
        %v672 = vadd.f32 %v407, %v671
        %v673 = vpop.f32.mrb[0].mxu0
        %v674 = vadd.f32 %v411, %v673
        %675 = vdwg.mxu0
        %v676 = vtanh.pop %v518
        %v677 = vtanh.pop %v520
        %v678 = vtanh.pop %v522
        %v679 = vtanh.pop %v524
        %v680 = vtanh.pop %v528
        %v681 = vtanh.pop %v530
        %v682 = vtanh.pop %v532
        %v683 = vtanh.pop %v534
        %v684 = vtanh.pop %v538
        %v685 = vtanh.pop %v540
        %v686 = vtanh.pop %v542
        %v687 = vtanh.pop %v544
        %v688 = vtanh.pop %v548
        %v689 = vtanh.pop %v550
        %v690 = vtanh.pop %v552
        %v691 = vtanh.pop %v554
        %v692 = vtanh.pop %v558
        %v693 = vtanh.pop %v560
        %v694 = vtanh.pop %v562
        %v695 = vtanh.pop %v564
        %v696 = vtanh.pop %v568
        %v697 = vtanh.pop %v570
        %v698 = vtanh.pop %v572
        %v699 = vtanh.pop %v574
        %v700 = vtanh.pop %v578
        %v701 = vtanh.pop %v580
        %v702 = vtanh.pop %v582
        %v703 = vtanh.pop %v584
        %v704 = vtanh.pop %v588
        %v705 = vtanh.pop %v590
        %v706 = vtanh.pop %v592
        %v707 = vtanh.pop %v594
        %v708 = vtanh.pop %v598
        %v709 = vtanh.pop %v600
        %v710 = vtanh.pop %v602
        %v711 = vtanh.pop %v604
        %v712 = vtanh.pop %v608
        %v713 = vtanh.pop %v610
        %v714 = vtanh.pop %v612
        %v715 = vtanh.pop %v614
        %v716 = vtanh.pop %v618
        %v717 = vtanh.pop %v620
        %v718 = vtanh.pop %v622
        %v719 = vtanh.pop %v624
        %v720 = vtanh.pop %v628
        %v721 = vtanh.pop %v630
        %v722 = vtanh.pop %v632
        %v723 = vtanh.pop %v634
        %v724 = vtanh.pop %v638
        %v725 = vtanh.pop %v640
        %v726 = vtanh.pop %v642
        %v727 = vtanh.pop %v644
        %v728 = vtanh.pop %v648
        %v729 = vtanh.pop %v650
        %v730 = vtanh.pop %v652
        %v731 = vtanh.pop %v654
        %v732 = vtanh.pop %v658
        %v733 = vtanh.pop %v660
        %v734 = vtanh.pop %v662
        %v735 = vtanh.pop %v664
        %v736 = vtanh.pop %v668
        %v737 = vtanh.pop %v670
        %v738 = vtanh.pop %v672
        %v739 = vtanh.pop %v674
        %v740 = vpack.c.bf16 %v678, %v676
        %v741 = vpack.c.bf16 %v679, %v677
        %v742 = vpack.c.bf16 %v682, %v680
        %v743 = vpack.c.bf16 %v683, %v681
        %v744 = vpack.c.bf16 %v686, %v684
        %v745 = vpack.c.bf16 %v687, %v685
        %v746 = vpack.c.bf16 %v690, %v688
        %v747 = vpack.c.bf16 %v691, %v689
        %v748 = vpack.c.bf16 %v694, %v692
        %v749 = vpack.c.bf16 %v695, %v693
        %v750 = vpack.c.bf16 %v698, %v696
        %v751 = vpack.c.bf16 %v699, %v697
        %v752 = vpack.c.bf16 %v702, %v700
        %v753 = vpack.c.bf16 %v703, %v701
        %v754 = vpack.c.bf16 %v706, %v704
        %v755 = vpack.c.bf16 %v707, %v705
        %v756 = vpack.c.bf16 %v710, %v708
        %v757 = vpack.c.bf16 %v711, %v709
        %v758 = vpack.c.bf16 %v714, %v712
        %v759 = vpack.c.bf16 %v715, %v713
        %v760 = vpack.c.bf16 %v718, %v716
        %v761 = vpack.c.bf16 %v719, %v717
        %v762 = vpack.c.bf16 %v722, %v720
        %v763 = vpack.c.bf16 %v723, %v721
        %v764 = vpack.c.bf16 %v726, %v724
        %v765 = vpack.c.bf16 %v727, %v725
        %v766 = vpack.c.bf16 %v730, %v728
        %v767 = vpack.c.bf16 %v731, %v729
        %v768 = vpack.c.bf16 %v734, %v732
        %v769 = vpack.c.bf16 %v735, %v733
        %v770 = vpack.c.bf16 %v738, %v736
        %v771 = vpack.c.bf16 %v739, %v737
        %v772 = vld [vmem:[%s3] sm:$0xff]
        %v773 = vld [vmem:[%s3 + $0x8] sm:$0xff]
        %v774 = vld [vmem:[%s3 + $0x10] sm:$0xff]
        %v775 = vld [vmem:[%s3 + $0x18] sm:$0xff]
        %v776 = vld [vmem:[%s3 + $0x20] sm:$0xff]
        %v777 = vld [vmem:[%s3 + $0x28] sm:$0xff]
        %v778 = vld [vmem:[%s3 + $0x30] sm:$0xff]
        %v779 = vld [vmem:[%s3 + $0x38] sm:$0xff]
        %v780 = vld [vmem:[%s3 + $0x40] sm:$0xff]
        %v781 = vld [vmem:[%s3 + $0x48] sm:$0xff]
        %v782 = vld [vmem:[%s3 + $0x50] sm:$0xff]
        %v783 = vld [vmem:[%s3 + $0x58] sm:$0xff]
        %v784 = vld [vmem:[%s3 + $0x60] sm:$0xff]
        %v785 = vld [vmem:[%s3 + $0x68] sm:$0xff]
        %v786 = vld [vmem:[%s3 + $0x70] sm:$0xff]
        %v787 = vld [vmem:[%s3 + $0x78] sm:$0xff]
        %v788 = vld [vmem:[%s3 + $0x80] sm:$0xff]
        %v789 = vld [vmem:[%s3 + $0x88] sm:$0xff]
        %v790 = vld [vmem:[%s3 + $0x90] sm:$0xff]
        %v791 = vld [vmem:[%s3 + $0x98] sm:$0xff]
        %v792 = vld [vmem:[%s3 + $0xa0] sm:$0xff]
        %v793 = vld [vmem:[%s3 + $0xa8] sm:$0xff]
        %v794 = vld [vmem:[%s3 + $0xb0] sm:$0xff]
        %v795 = vld [vmem:[%s3 + $0xb8] sm:$0xff]
        %v796 = vld [vmem:[%s3 + $0xc0] sm:$0xff]
        %v797 = vld [vmem:[%s3 + $0xc8] sm:$0xff]
        %v798 = vld [vmem:[%s3 + $0xd0] sm:$0xff]
        %v799 = vld [vmem:[%s3 + $0xd8] sm:$0xff]
        %v800 = vld [vmem:[%s3 + $0xe0] sm:$0xff]
        %v801 = vld [vmem:[%s3 + $0xe8] sm:$0xff]
        %v802 = vld [vmem:[%s3 + $0xf0] sm:$0xff]
        %v803 = vld [vmem:[%s3 + $0xf8] sm:$0xff]
        %v804 = vld [vmem:[%s4] sm:$0x3]
        %v806 = vlaneseq
        %v807 = vshrl.u32 %v806, 7
        %v808 = vsub.s32 0, %v807
        %v809 = vrot.slane %v804, %v808
        %v810 = vlaneseq
        %v811 = vshrl.u32 %v810, 7
        %v812 = vsub.s32 1, %v811
        %v813 = vrot.slane %v804, %v812
        %v848 = vunpack.c.l.b16 %v772
        %v849 = vunpack.c.h.b16 %v772
        %v850 = vunpack.c.l.b16 %v773
        %v851 = vunpack.c.h.b16 %v773
        %v852 = vunpack.c.l.b16 %v774
        %v853 = vunpack.c.h.b16 %v774
        %v854 = vunpack.c.l.b16 %v775
        %v855 = vunpack.c.h.b16 %v775
        %v856 = vunpack.c.l.b16 %v776
        %v857 = vunpack.c.h.b16 %v776
        %v858 = vunpack.c.l.b16 %v777
        %v859 = vunpack.c.h.b16 %v777
        %v860 = vunpack.c.l.b16 %v778
        %v861 = vunpack.c.h.b16 %v778
        %v862 = vunpack.c.l.b16 %v779
        %v863 = vunpack.c.h.b16 %v779
        %v864 = vunpack.c.l.b16 %v780
        %v865 = vunpack.c.h.b16 %v780
        %v866 = vunpack.c.l.b16 %v781
        %v867 = vunpack.c.h.b16 %v781
        %v868 = vunpack.c.l.b16 %v782
        %v869 = vunpack.c.h.b16 %v782
        %v870 = vunpack.c.l.b16 %v783
        %v871 = vunpack.c.h.b16 %v783
        %v872 = vunpack.c.l.b16 %v784
        %v873 = vunpack.c.h.b16 %v784
        %v874 = vunpack.c.l.b16 %v785
        %v875 = vunpack.c.h.b16 %v785
        %v876 = vunpack.c.l.b16 %v786
        %v877 = vunpack.c.h.b16 %v786
        %v878 = vunpack.c.l.b16 %v787
        %v879 = vunpack.c.h.b16 %v787
        %v880 = vunpack.c.l.b16 %v788
        %v881 = vunpack.c.h.b16 %v788
        %v882 = vunpack.c.l.b16 %v789
        %v883 = vunpack.c.h.b16 %v789
        %v884 = vunpack.c.l.b16 %v790
        %v885 = vunpack.c.h.b16 %v790
        %v886 = vunpack.c.l.b16 %v791
        %v887 = vunpack.c.h.b16 %v791
        %v888 = vunpack.c.l.b16 %v792
        %v889 = vunpack.c.h.b16 %v792
        %v890 = vunpack.c.l.b16 %v793
        %v891 = vunpack.c.h.b16 %v793
        %v892 = vunpack.c.l.b16 %v794
        %v893 = vunpack.c.h.b16 %v794
        %v894 = vunpack.c.l.b16 %v795
        %v895 = vunpack.c.h.b16 %v795
        %v896 = vunpack.c.l.b16 %v796
        %v897 = vunpack.c.h.b16 %v796
        %v898 = vunpack.c.l.b16 %v797
        %v899 = vunpack.c.h.b16 %v797
        %v900 = vunpack.c.l.b16 %v798
        %v901 = vunpack.c.h.b16 %v798
        %v902 = vunpack.c.l.b16 %v799
        %v903 = vunpack.c.h.b16 %v799
        %v904 = vunpack.c.l.b16 %v800
        %v905 = vunpack.c.h.b16 %v800
        %v906 = vunpack.c.l.b16 %v801
        %v907 = vunpack.c.h.b16 %v801
        %v908 = vunpack.c.l.b16 %v802
        %v909 = vunpack.c.h.b16 %v802
        %v910 = vunpack.c.l.b16 %v803
        %v911 = vunpack.c.h.b16 %v803
        %v912 = vpack.c.b16 %v850, %v848
        %v913 = vpack.c.b16 %v851, %v849
        %v914 = vpack.c.b16 %v854, %v852
        %v915 = vpack.c.b16 %v855, %v853
        %v916 = vpack.c.b16 %v858, %v856
        %v917 = vpack.c.b16 %v859, %v857
        %v918 = vpack.c.b16 %v862, %v860
        %v919 = vpack.c.b16 %v863, %v861
        %v920 = vpack.c.b16 %v866, %v864
        %v921 = vpack.c.b16 %v867, %v865
        %v922 = vpack.c.b16 %v870, %v868
        %v923 = vpack.c.b16 %v871, %v869
        %v924 = vpack.c.b16 %v874, %v872
        %v925 = vpack.c.b16 %v875, %v873
        %v926 = vpack.c.b16 %v878, %v876
        %v927 = vpack.c.b16 %v879, %v877
        %v928 = vpack.c.b16 %v882, %v880
        %v929 = vpack.c.b16 %v883, %v881
        %v930 = vpack.c.b16 %v886, %v884
        %v931 = vpack.c.b16 %v887, %v885
        %v932 = vpack.c.b16 %v890, %v888
        %v933 = vpack.c.b16 %v891, %v889
        %v934 = vpack.c.b16 %v894, %v892
        %v935 = vpack.c.b16 %v895, %v893
        %v936 = vpack.c.b16 %v898, %v896
        %v937 = vpack.c.b16 %v899, %v897
        %v938 = vpack.c.b16 %v902, %v900
        %v939 = vpack.c.b16 %v903, %v901
        %v940 = vpack.c.b16 %v906, %v904
        %v941 = vpack.c.b16 %v907, %v905
        %v942 = vpack.c.b16 %v910, %v908
        %v943 = vpack.c.b16 %v911, %v909
        %976 = vmatprep.subr.bf16.mxu0 %v913
        %977 = vmatpush1.bf16.msra.mxu0 %v912
        %978 = vmatprep.subr.bf16.mxu0 %v915
        %979 = vmatpush1.bf16.msra.mxu0 %v914
        %980 = vmatprep.subr.bf16.mxu0 %v917
        %981 = vmatpush1.bf16.msra.mxu0 %v916
        %982 = vmatprep.subr.bf16.mxu0 %v919
        %983 = vmatpush1.bf16.msra.mxu0 %v918
        %984 = vmatprep.subr.bf16.mxu0 %v921
        %985 = vmatpush1.bf16.msra.mxu0 %v920
        %986 = vmatprep.subr.bf16.mxu0 %v923
        %987 = vmatpush1.bf16.msra.mxu0 %v922
        %988 = vmatprep.subr.bf16.mxu0 %v925
        %989 = vmatpush1.bf16.msra.mxu0 %v924
        %990 = vmatprep.subr.bf16.mxu0 %v927
        %991 = vmatpush1.bf16.msra.mxu0 %v926
        %992 = vmatprep.subr.bf16.mxu0 %v929
        %993 = vmatpush1.bf16.msra.mxu0 %v928
        %994 = vmatprep.subr.bf16.mxu0 %v931
        %995 = vmatpush1.bf16.msra.mxu0 %v930
        %996 = vmatprep.subr.bf16.mxu0 %v933
        %997 = vmatpush1.bf16.msra.mxu0 %v932
        %998 = vmatprep.subr.bf16.mxu0 %v935
        %999 = vmatpush1.bf16.msra.mxu0 %v934
        %1000 = vmatprep.subr.bf16.mxu0 %v937
        %1001 = vmatpush1.bf16.msra.mxu0 %v936
        %1002 = vmatprep.subr.bf16.mxu0 %v939
        %1003 = vmatpush1.bf16.msra.mxu0 %v938
        %1004 = vmatprep.subr.bf16.mxu0 %v941
        %1005 = vmatpush1.bf16.msra.mxu0 %v940
        %1006 = vmatprep.subr.bf16.mxu0 %v943
        %1007 = vmatpush1.bf16.msra.mxu0 %v942
        %1008 = vmatprep.mubr.bf16.mxu0 %v741
        %1009 = vmatmul.mubr.bf16.gmra.mrb[0].mxu0 %v740
        %v1010 = vpop.f32.mrb[0].mxu0
        %v1011 = vadd.f32 %v809, %v1010
        %v1012 = vpop.f32.mrb[0].mxu0
        %v1013 = vadd.f32 %v813, %v1012
        %v1014 = vpop.f32.mrb[0].mxu0
        %v1015 = vadd.f32 %v809, %v1014
        %v1016 = vpop.f32.mrb[0].mxu0
        %v1017 = vadd.f32 %v813, %v1016
        %1018 = vmatprep.mubr.bf16.mxu0 %v743
        %1019 = vmatmul.mubr.bf16.gmra.mrb[0].mxu0 %v742
        %v1020 = vpop.f32.mrb[0].mxu0
        %v1021 = vadd.f32 %v809, %v1020
        %v1022 = vpop.f32.mrb[0].mxu0
        %v1023 = vadd.f32 %v813, %v1022
        %v1024 = vpop.f32.mrb[0].mxu0
        %v1025 = vadd.f32 %v809, %v1024
        %v1026 = vpop.f32.mrb[0].mxu0
        %v1027 = vadd.f32 %v813, %v1026
        %1028 = vmatprep.mubr.bf16.mxu0 %v745
        %1029 = vmatmul.mubr.bf16.gmra.mrb[0].mxu0 %v744
        %v1030 = vpop.f32.mrb[0].mxu0
        %v1031 = vadd.f32 %v809, %v1030
        %v1032 = vpop.f32.mrb[0].mxu0
        %v1033 = vadd.f32 %v813, %v1032
        %v1034 = vpop.f32.mrb[0].mxu0
        %v1035 = vadd.f32 %v809, %v1034
        %v1036 = vpop.f32.mrb[0].mxu0
        %v1037 = vadd.f32 %v813, %v1036
        %1038 = vmatprep.mubr.bf16.mxu0 %v747
        %1039 = vmatmul.mubr.bf16.gmra.mrb[0].mxu0 %v746
        %v1040 = vpop.f32.mrb[0].mxu0
        %v1041 = vadd.f32 %v809, %v1040
        %v1042 = vpop.f32.mrb[0].mxu0
        %v1043 = vadd.f32 %v813, %v1042
        %v1044 = vpop.f32.mrb[0].mxu0
        %v1045 = vadd.f32 %v809, %v1044
        %v1046 = vpop.f32.mrb[0].mxu0
        %v1047 = vadd.f32 %v813, %v1046
        %1048 = vmatprep.mubr.bf16.mxu0 %v749
        %1049 = vmatmul.mubr.bf16.gmra.mrb[0].mxu0 %v748
        %v1050 = vpop.f32.mrb[0].mxu0
        %v1051 = vadd.f32 %v809, %v1050
        %v1052 = vpop.f32.mrb[0].mxu0
        %v1053 = vadd.f32 %v813, %v1052
        %v1054 = vpop.f32.mrb[0].mxu0
        %v1055 = vadd.f32 %v809, %v1054
        %v1056 = vpop.f32.mrb[0].mxu0
        %v1057 = vadd.f32 %v813, %v1056
        %1058 = vmatprep.mubr.bf16.mxu0 %v751
        %1059 = vmatmul.mubr.bf16.gmra.mrb[0].mxu0 %v750
        %v1060 = vpop.f32.mrb[0].mxu0
        %v1061 = vadd.f32 %v809, %v1060
        %v1062 = vpop.f32.mrb[0].mxu0
        %v1063 = vadd.f32 %v813, %v1062
        %v1064 = vpop.f32.mrb[0].mxu0
        %v1065 = vadd.f32 %v809, %v1064
        %v1066 = vpop.f32.mrb[0].mxu0
        %v1067 = vadd.f32 %v813, %v1066
        %1068 = vmatprep.mubr.bf16.mxu0 %v753
        %1069 = vmatmul.mubr.bf16.gmra.mrb[0].mxu0 %v752
        %v1070 = vpop.f32.mrb[0].mxu0
        %v1071 = vadd.f32 %v809, %v1070
        %v1072 = vpop.f32.mrb[0].mxu0
        %v1073 = vadd.f32 %v813, %v1072
        %v1074 = vpop.f32.mrb[0].mxu0
        %v1075 = vadd.f32 %v809, %v1074
        %v1076 = vpop.f32.mrb[0].mxu0
        %v1077 = vadd.f32 %v813, %v1076
        %1078 = vmatprep.mubr.bf16.mxu0 %v755
        %1079 = vmatmul.mubr.bf16.gmra.mrb[0].mxu0 %v754
        %v1080 = vpop.f32.mrb[0].mxu0
        %v1081 = vadd.f32 %v809, %v1080
        %v1082 = vpop.f32.mrb[0].mxu0
        %v1083 = vadd.f32 %v813, %v1082
        %v1084 = vpop.f32.mrb[0].mxu0
        %v1085 = vadd.f32 %v809, %v1084
        %v1086 = vpop.f32.mrb[0].mxu0
        %v1087 = vadd.f32 %v813, %v1086
        %1088 = vmatprep.mubr.bf16.mxu0 %v757
        %1089 = vmatmul.mubr.bf16.gmra.mrb[0].mxu0 %v756
        %v1090 = vpop.f32.mrb[0].mxu0
        %v1091 = vadd.f32 %v809, %v1090
        %v1092 = vpop.f32.mrb[0].mxu0
        %v1093 = vadd.f32 %v813, %v1092
        %v1094 = vpop.f32.mrb[0].mxu0
        %v1095 = vadd.f32 %v809, %v1094
        %v1096 = vpop.f32.mrb[0].mxu0
        %v1097 = vadd.f32 %v813, %v1096
        %1098 = vmatprep.mubr.bf16.mxu0 %v759
        %1099 = vmatmul.mubr.bf16.gmra.mrb[0].mxu0 %v758
        %v1100 = vpop.f32.mrb[0].mxu0
        %v1101 = vadd.f32 %v809, %v1100
        %v1102 = vpop.f32.mrb[0].mxu0
        %v1103 = vadd.f32 %v813, %v1102
        %v1104 = vpop.f32.mrb[0].mxu0
        %v1105 = vadd.f32 %v809, %v1104
        %v1106 = vpop.f32.mrb[0].mxu0
        %v1107 = vadd.f32 %v813, %v1106
        %1108 = vmatprep.mubr.bf16.mxu0 %v761
        %1109 = vmatmul.mubr.bf16.gmra.mrb[0].mxu0 %v760
        %v1110 = vpop.f32.mrb[0].mxu0
        %v1111 = vadd.f32 %v809, %v1110
        %v1112 = vpop.f32.mrb[0].mxu0
        %v1113 = vadd.f32 %v813, %v1112
        %v1114 = vpop.f32.mrb[0].mxu0
        %v1115 = vadd.f32 %v809, %v1114
        %v1116 = vpop.f32.mrb[0].mxu0
        %v1117 = vadd.f32 %v813, %v1116
        %1118 = vmatprep.mubr.bf16.mxu0 %v763
        %1119 = vmatmul.mubr.bf16.gmra.mrb[0].mxu0 %v762
        %v1120 = vpop.f32.mrb[0].mxu0
        %v1121 = vadd.f32 %v809, %v1120
        %v1122 = vpop.f32.mrb[0].mxu0
        %v1123 = vadd.f32 %v813, %v1122
        %v1124 = vpop.f32.mrb[0].mxu0
        %v1125 = vadd.f32 %v809, %v1124
        %v1126 = vpop.f32.mrb[0].mxu0
        %v1127 = vadd.f32 %v813, %v1126
        %1128 = vmatprep.mubr.bf16.mxu0 %v765
        %1129 = vmatmul.mubr.bf16.gmra.mrb[0].mxu0 %v764
        %v1130 = vpop.f32.mrb[0].mxu0
        %v1131 = vadd.f32 %v809, %v1130
        %v1132 = vpop.f32.mrb[0].mxu0
        %v1133 = vadd.f32 %v813, %v1132
        %v1134 = vpop.f32.mrb[0].mxu0
        %v1135 = vadd.f32 %v809, %v1134
        %v1136 = vpop.f32.mrb[0].mxu0
        %v1137 = vadd.f32 %v813, %v1136
        %1138 = vmatprep.mubr.bf16.mxu0 %v767
        %1139 = vmatmul.mubr.bf16.gmra.mrb[0].mxu0 %v766
        %v1140 = vpop.f32.mrb[0].mxu0
        %v1141 = vadd.f32 %v809, %v1140
        %v1142 = vpop.f32.mrb[0].mxu0
        %v1143 = vadd.f32 %v813, %v1142
        %v1144 = vpop.f32.mrb[0].mxu0
        %v1145 = vadd.f32 %v809, %v1144
        %v1146 = vpop.f32.mrb[0].mxu0
        %v1147 = vadd.f32 %v813, %v1146
        %1148 = vmatprep.mubr.bf16.mxu0 %v769
        %1149 = vmatmul.mubr.bf16.gmra.mrb[0].mxu0 %v768
        %v1150 = vpop.f32.mrb[0].mxu0
        %v1151 = vadd.f32 %v809, %v1150
        %v1152 = vpop.f32.mrb[0].mxu0
        %v1153 = vadd.f32 %v813, %v1152
        %v1154 = vpop.f32.mrb[0].mxu0
        %v1155 = vadd.f32 %v809, %v1154
        %v1156 = vpop.f32.mrb[0].mxu0
        %v1157 = vadd.f32 %v813, %v1156
        %1158 = vmatprep.mubr.bf16.mxu0 %v771
        %1159 = vmatmul.mubr.bf16.gmra.mrb[0].mxu0 %v770
        %v1160 = vpop.f32.mrb[0].mxu0
        %v1161 = vadd.f32 %v809, %v1160
        %v1162 = vpop.f32.mrb[0].mxu0
        %v1163 = vadd.f32 %v813, %v1162
        %v1164 = vpop.f32.mrb[0].mxu0
        %v1165 = vadd.f32 %v809, %v1164
        %v1166 = vpop.f32.mrb[0].mxu0
        %v1167 = vadd.f32 %v813, %v1166
        %1168 = vdwg.mxu0
        %v1169 = vtanh.pop %v1011
        %v1170 = vtanh.pop %v1013
        %v1171 = vtanh.pop %v1015
        %v1172 = vtanh.pop %v1017
        %v1173 = vtanh.pop %v1021
        %v1174 = vtanh.pop %v1023
        %v1175 = vtanh.pop %v1025
        %v1176 = vtanh.pop %v1027
        %v1177 = vtanh.pop %v1031
        %v1178 = vtanh.pop %v1033
        %v1179 = vtanh.pop %v1035
        %v1180 = vtanh.pop %v1037
        %v1181 = vtanh.pop %v1041
        %v1182 = vtanh.pop %v1043
        %v1183 = vtanh.pop %v1045
        %v1184 = vtanh.pop %v1047
        %v1185 = vtanh.pop %v1051
        %v1186 = vtanh.pop %v1053
        %v1187 = vtanh.pop %v1055
        %v1188 = vtanh.pop %v1057
        %v1189 = vtanh.pop %v1061
        %v1190 = vtanh.pop %v1063
        %v1191 = vtanh.pop %v1065
        %v1192 = vtanh.pop %v1067
        %v1193 = vtanh.pop %v1071
        %v1194 = vtanh.pop %v1073
        %v1195 = vtanh.pop %v1075
        %v1196 = vtanh.pop %v1077
        %v1197 = vtanh.pop %v1081
        %v1198 = vtanh.pop %v1083
        %v1199 = vtanh.pop %v1085
        %v1200 = vtanh.pop %v1087
        %v1201 = vtanh.pop %v1091
        %v1202 = vtanh.pop %v1093
        %v1203 = vtanh.pop %v1095
        %v1204 = vtanh.pop %v1097
        %v1205 = vtanh.pop %v1101
        %v1206 = vtanh.pop %v1103
        %v1207 = vtanh.pop %v1105
        %v1208 = vtanh.pop %v1107
        %v1209 = vtanh.pop %v1111
        %v1210 = vtanh.pop %v1113
        %v1211 = vtanh.pop %v1115
        %v1212 = vtanh.pop %v1117
        %v1213 = vtanh.pop %v1121
        %v1214 = vtanh.pop %v1123
        %v1215 = vtanh.pop %v1125
        %v1216 = vtanh.pop %v1127
        %v1217 = vtanh.pop %v1131
        %v1218 = vtanh.pop %v1133
        %v1219 = vtanh.pop %v1135
        %v1220 = vtanh.pop %v1137
        %v1221 = vtanh.pop %v1141
        %v1222 = vtanh.pop %v1143
        %v1223 = vtanh.pop %v1145
        %v1224 = vtanh.pop %v1147
        %v1225 = vtanh.pop %v1151
        %v1226 = vtanh.pop %v1153
        %v1227 = vtanh.pop %v1155
        %v1228 = vtanh.pop %v1157
        %v1229 = vtanh.pop %v1161
        %v1230 = vtanh.pop %v1163
        %v1231 = vtanh.pop %v1165
        %v1232 = vtanh.pop %v1167
        %v1233 = vpack.c.bf16 %v1171, %v1169
        %v1234 = vpack.c.bf16 %v1172, %v1170
        %v1235 = vpack.c.bf16 %v1175, %v1173
        %v1236 = vpack.c.bf16 %v1176, %v1174
        %v1237 = vpack.c.bf16 %v1179, %v1177
        %v1238 = vpack.c.bf16 %v1180, %v1178
        %v1239 = vpack.c.bf16 %v1183, %v1181
        %v1240 = vpack.c.bf16 %v1184, %v1182
        %v1241 = vpack.c.bf16 %v1187, %v1185
        %v1242 = vpack.c.bf16 %v1188, %v1186
        %v1243 = vpack.c.bf16 %v1191, %v1189
        %v1244 = vpack.c.bf16 %v1192, %v1190
        %v1245 = vpack.c.bf16 %v1195, %v1193
        %v1246 = vpack.c.bf16 %v1196, %v1194
        %v1247 = vpack.c.bf16 %v1199, %v1197
        %v1248 = vpack.c.bf16 %v1200, %v1198
        %v1249 = vpack.c.bf16 %v1203, %v1201
        %v1250 = vpack.c.bf16 %v1204, %v1202
        %v1251 = vpack.c.bf16 %v1207, %v1205
        %v1252 = vpack.c.bf16 %v1208, %v1206
        %v1253 = vpack.c.bf16 %v1211, %v1209
        %v1254 = vpack.c.bf16 %v1212, %v1210
        %v1255 = vpack.c.bf16 %v1215, %v1213
        %v1256 = vpack.c.bf16 %v1216, %v1214
        %v1257 = vpack.c.bf16 %v1219, %v1217
        %v1258 = vpack.c.bf16 %v1220, %v1218
        %v1259 = vpack.c.bf16 %v1223, %v1221
        %v1260 = vpack.c.bf16 %v1224, %v1222
        %v1261 = vpack.c.bf16 %v1227, %v1225
        %v1262 = vpack.c.bf16 %v1228, %v1226
        %v1263 = vpack.c.bf16 %v1231, %v1229
        %v1264 = vpack.c.bf16 %v1232, %v1230
        %v1265 = vld [vmem:[%s5] sm:$0xff]
        %v1266 = vld [vmem:[%s5 + $0x8] sm:$0xff]
        %v1267 = vld [vmem:[%s5 + $0x10] sm:$0xff]
        %v1268 = vld [vmem:[%s5 + $0x18] sm:$0xff]
        %v1269 = vld [vmem:[%s5 + $0x20] sm:$0xff]
        %v1270 = vld [vmem:[%s5 + $0x28] sm:$0xff]
        %v1271 = vld [vmem:[%s5 + $0x30] sm:$0xff]
        %v1272 = vld [vmem:[%s5 + $0x38] sm:$0xff]
        %v1273 = vld [vmem:[%s5 + $0x40] sm:$0xff]
        %v1274 = vld [vmem:[%s5 + $0x48] sm:$0xff]
        %v1275 = vld [vmem:[%s5 + $0x50] sm:$0xff]
        %v1276 = vld [vmem:[%s5 + $0x58] sm:$0xff]
        %v1277 = vld [vmem:[%s5 + $0x60] sm:$0xff]
        %v1278 = vld [vmem:[%s5 + $0x68] sm:$0xff]
        %v1279 = vld [vmem:[%s5 + $0x70] sm:$0xff]
        %v1280 = vld [vmem:[%s5 + $0x78] sm:$0xff]
        %v1281 = vld [vmem:[%s5 + $0x80] sm:$0xff]
        %v1282 = vld [vmem:[%s5 + $0x88] sm:$0xff]
        %v1283 = vld [vmem:[%s5 + $0x90] sm:$0xff]
        %v1284 = vld [vmem:[%s5 + $0x98] sm:$0xff]
        %v1285 = vld [vmem:[%s5 + $0xa0] sm:$0xff]
        %v1286 = vld [vmem:[%s5 + $0xa8] sm:$0xff]
        %v1287 = vld [vmem:[%s5 + $0xb0] sm:$0xff]
        %v1288 = vld [vmem:[%s5 + $0xb8] sm:$0xff]
        %v1289 = vld [vmem:[%s5 + $0xc0] sm:$0xff]
        %v1290 = vld [vmem:[%s5 + $0xc8] sm:$0xff]
        %v1291 = vld [vmem:[%s5 + $0xd0] sm:$0xff]
        %v1292 = vld [vmem:[%s5 + $0xd8] sm:$0xff]
        %v1293 = vld [vmem:[%s5 + $0xe0] sm:$0xff]
        %v1294 = vld [vmem:[%s5 + $0xe8] sm:$0xff]
        %v1295 = vld [vmem:[%s5 + $0xf0] sm:$0xff]
        %v1296 = vld [vmem:[%s5 + $0xf8] sm:$0xff]
        %v1297 = vld [vmem:[%s6] sm:$0x3]
        %v1299 = vlaneseq
        %v1300 = vshrl.u32 %v1299, 7
        %v1301 = vsub.s32 0, %v1300
        %v1302 = vrot.slane %v1297, %v1301
        %v1303 = vlaneseq
        %v1304 = vshrl.u32 %v1303, 7
        %v1305 = vsub.s32 1, %v1304
        %v1306 = vrot.slane %v1297, %v1305
        %v1341 = vunpack.c.l.b16 %v1265
        %v1342 = vunpack.c.h.b16 %v1265
        %v1343 = vunpack.c.l.b16 %v1266
        %v1344 = vunpack.c.h.b16 %v1266
        %v1345 = vunpack.c.l.b16 %v1267
        %v1346 = vunpack.c.h.b16 %v1267
        %v1347 = vunpack.c.l.b16 %v1268
        %v1348 = vunpack.c.h.b16 %v1268
        %v1349 = vunpack.c.l.b16 %v1269
        %v1350 = vunpack.c.h.b16 %v1269
        %v1351 = vunpack.c.l.b16 %v1270
        %v1352 = vunpack.c.h.b16 %v1270
        %v1353 = vunpack.c.l.b16 %v1271
        %v1354 = vunpack.c.h.b16 %v1271
        %v1355 = vunpack.c.l.b16 %v1272
        %v1356 = vunpack.c.h.b16 %v1272
        %v1357 = vunpack.c.l.b16 %v1273
        %v1358 = vunpack.c.h.b16 %v1273
        %v1359 = vunpack.c.l.b16 %v1274
        %v1360 = vunpack.c.h.b16 %v1274
        %v1361 = vunpack.c.l.b16 %v1275
        %v1362 = vunpack.c.h.b16 %v1275
        %v1363 = vunpack.c.l.b16 %v1276
        %v1364 = vunpack.c.h.b16 %v1276
        %v1365 = vunpack.c.l.b16 %v1277
        %v1366 = vunpack.c.h.b16 %v1277
        %v1367 = vunpack.c.l.b16 %v1278
        %v1368 = vunpack.c.h.b16 %v1278
        %v1369 = vunpack.c.l.b16 %v1279
        %v1370 = vunpack.c.h.b16 %v1279
        %v1371 = vunpack.c.l.b16 %v1280
        %v1372 = vunpack.c.h.b16 %v1280
        %v1373 = vunpack.c.l.b16 %v1281
        %v1374 = vunpack.c.h.b16 %v1281
        %v1375 = vunpack.c.l.b16 %v1282
        %v1376 = vunpack.c.h.b16 %v1282
        %v1377 = vunpack.c.l.b16 %v1283
        %v1378 = vunpack.c.h.b16 %v1283
        %v1379 = vunpack.c.l.b16 %v1284
        %v1380 = vunpack.c.h.b16 %v1284
        %v1381 = vunpack.c.l.b16 %v1285
        %v1382 = vunpack.c.h.b16 %v1285
        %v1383 = vunpack.c.l.b16 %v1286
        %v1384 = vunpack.c.h.b16 %v1286
        %v1385 = vunpack.c.l.b16 %v1287
        %v1386 = vunpack.c.h.b16 %v1287
        %v1387 = vunpack.c.l.b16 %v1288
        %v1388 = vunpack.c.h.b16 %v1288
        %v1389 = vunpack.c.l.b16 %v1289
        %v1390 = vunpack.c.h.b16 %v1289
        %v1391 = vunpack.c.l.b16 %v1290
        %v1392 = vunpack.c.h.b16 %v1290
        %v1393 = vunpack.c.l.b16 %v1291
        %v1394 = vunpack.c.h.b16 %v1291
        %v1395 = vunpack.c.l.b16 %v1292
        %v1396 = vunpack.c.h.b16 %v1292
        %v1397 = vunpack.c.l.b16 %v1293
        %v1398 = vunpack.c.h.b16 %v1293
        %v1399 = vunpack.c.l.b16 %v1294
        %v1400 = vunpack.c.h.b16 %v1294
        %v1401 = vunpack.c.l.b16 %v1295
        %v1402 = vunpack.c.h.b16 %v1295
        %v1403 = vunpack.c.l.b16 %v1296
        %v1404 = vunpack.c.h.b16 %v1296
        %v1405 = vpack.c.b16 %v1343, %v1341
        %v1406 = vpack.c.b16 %v1344, %v1342
        %v1407 = vpack.c.b16 %v1347, %v1345
        %v1408 = vpack.c.b16 %v1348, %v1346
        %v1409 = vpack.c.b16 %v1351, %v1349
        %v1410 = vpack.c.b16 %v1352, %v1350
        %v1411 = vpack.c.b16 %v1355, %v1353
        %v1412 = vpack.c.b16 %v1356, %v1354
        %v1413 = vpack.c.b16 %v1359, %v1357
        %v1414 = vpack.c.b16 %v1360, %v1358
        %v1415 = vpack.c.b16 %v1363, %v1361
        %v1416 = vpack.c.b16 %v1364, %v1362
        %v1417 = vpack.c.b16 %v1367, %v1365
        %v1418 = vpack.c.b16 %v1368, %v1366
        %v1419 = vpack.c.b16 %v1371, %v1369
        %v1420 = vpack.c.b16 %v1372, %v1370
        %v1421 = vpack.c.b16 %v1375, %v1373
        %v1422 = vpack.c.b16 %v1376, %v1374
        %v1423 = vpack.c.b16 %v1379, %v1377
        %v1424 = vpack.c.b16 %v1380, %v1378
        %v1425 = vpack.c.b16 %v1383, %v1381
        %v1426 = vpack.c.b16 %v1384, %v1382
        %v1427 = vpack.c.b16 %v1387, %v1385
        %v1428 = vpack.c.b16 %v1388, %v1386
        %v1429 = vpack.c.b16 %v1391, %v1389
        %v1430 = vpack.c.b16 %v1392, %v1390
        %v1431 = vpack.c.b16 %v1395, %v1393
        %v1432 = vpack.c.b16 %v1396, %v1394
        %v1433 = vpack.c.b16 %v1399, %v1397
        %v1434 = vpack.c.b16 %v1400, %v1398
        %v1435 = vpack.c.b16 %v1403, %v1401
        %v1436 = vpack.c.b16 %v1404, %v1402
        %1469 = vmatprep.subr.bf16.mxu0 %v1406
        %1470 = vmatpush1.bf16.msra.mxu0 %v1405
        %1471 = vmatprep.subr.bf16.mxu0 %v1408
        %1472 = vmatpush1.bf16.msra.mxu0 %v1407
        %1473 = vmatprep.subr.bf16.mxu0 %v1410
        %1474 = vmatpush1.bf16.msra.mxu0 %v1409
        %1475 = vmatprep.subr.bf16.mxu0 %v1412
        %1476 = vmatpush1.bf16.msra.mxu0 %v1411
        %1477 = vmatprep.subr.bf16.mxu0 %v1414
        %1478 = vmatpush1.bf16.msra.mxu0 %v1413
        %1479 = vmatprep.subr.bf16.mxu0 %v1416
        %1480 = vmatpush1.bf16.msra.mxu0 %v1415
        %1481 = vmatprep.subr.bf16.mxu0 %v1418
        %1482 = vmatpush1.bf16.msra.mxu0 %v1417
        %1483 = vmatprep.subr.bf16.mxu0 %v1420
        %1484 = vmatpush1.bf16.msra.mxu0 %v1419
        %1485 = vmatprep.subr.bf16.mxu0 %v1422
        %1486 = vmatpush1.bf16.msra.mxu0 %v1421
        %1487 = vmatprep.subr.bf16.mxu0 %v1424
        %1488 = vmatpush1.bf16.msra.mxu0 %v1423
        %1489 = vmatprep.subr.bf16.mxu0 %v1426
        %1490 = vmatpush1.bf16.msra.mxu0 %v1425
        %1491 = vmatprep.subr.bf16.mxu0 %v1428
        %1492 = vmatpush1.bf16.msra.mxu0 %v1427
        %1493 = vmatprep.subr.bf16.mxu0 %v1430
        %1494 = vmatpush1.bf16.msra.mxu0 %v1429
        %1495 = vmatprep.subr.bf16.mxu0 %v1432
        %1496 = vmatpush1.bf16.msra.mxu0 %v1431
        %1497 = vmatprep.subr.bf16.mxu0 %v1434
        %1498 = vmatpush1.bf16.msra.mxu0 %v1433
        %1499 = vmatprep.subr.bf16.mxu0 %v1436
        %1500 = vmatpush1.bf16.msra.mxu0 %v1435
        %1501 = vmatprep.mubr.bf16.mxu0 %v1234
        %1502 = vmatmul.mubr.bf16.gmra.mrb[0].mxu0 %v1233
        %v1503 = vpop.f32.mrb[0].mxu0
        %v1504 = vadd.f32 %v1302, %v1503
        %v1505 = vpop.f32.mrb[0].mxu0
        %v1506 = vadd.f32 %v1306, %v1505
        %v1507 = vpop.f32.mrb[0].mxu0
        %v1508 = vadd.f32 %v1302, %v1507
        %v1509 = vpop.f32.mrb[0].mxu0
        %v1510 = vadd.f32 %v1306, %v1509
        %1511 = vmatprep.mubr.bf16.mxu0 %v1236
        %1512 = vmatmul.mubr.bf16.gmra.mrb[0].mxu0 %v1235
        %v1513 = vpop.f32.mrb[0].mxu0
        %v1514 = vadd.f32 %v1302, %v1513
        %v1515 = vpop.f32.mrb[0].mxu0
        %v1516 = vadd.f32 %v1306, %v1515
        %v1517 = vpop.f32.mrb[0].mxu0
        %v1518 = vadd.f32 %v1302, %v1517
        %v1519 = vpop.f32.mrb[0].mxu0
        %v1520 = vadd.f32 %v1306, %v1519
        %1521 = vmatprep.mubr.bf16.mxu0 %v1238
        %1522 = vmatmul.mubr.bf16.gmra.mrb[0].mxu0 %v1237
        %v1523 = vpop.f32.mrb[0].mxu0
        %v1524 = vadd.f32 %v1302, %v1523
        %v1525 = vpop.f32.mrb[0].mxu0
        %v1526 = vadd.f32 %v1306, %v1525
        %v1527 = vpop.f32.mrb[0].mxu0
        %v1528 = vadd.f32 %v1302, %v1527
        %v1529 = vpop.f32.mrb[0].mxu0
        %v1530 = vadd.f32 %v1306, %v1529
        %1531 = vmatprep.mubr.bf16.mxu0 %v1240
        %1532 = vmatmul.mubr.bf16.gmra.mrb[0].mxu0 %v1239
        %v1533 = vpop.f32.mrb[0].mxu0
        %v1534 = vadd.f32 %v1302, %v1533
        %v1535 = vpop.f32.mrb[0].mxu0
        %v1536 = vadd.f32 %v1306, %v1535
        %v1537 = vpop.f32.mrb[0].mxu0
        %v1538 = vadd.f32 %v1302, %v1537
        %v1539 = vpop.f32.mrb[0].mxu0
        %v1540 = vadd.f32 %v1306, %v1539
        %1541 = vmatprep.mubr.bf16.mxu0 %v1242
        %1542 = vmatmul.mubr.bf16.gmra.mrb[0].mxu0 %v1241
        %v1543 = vpop.f32.mrb[0].mxu0
        %v1544 = vadd.f32 %v1302, %v1543
        %v1545 = vpop.f32.mrb[0].mxu0
        %v1546 = vadd.f32 %v1306, %v1545
        %v1547 = vpop.f32.mrb[0].mxu0
        %v1548 = vadd.f32 %v1302, %v1547
        %v1549 = vpop.f32.mrb[0].mxu0
        %v1550 = vadd.f32 %v1306, %v1549
        %1551 = vmatprep.mubr.bf16.mxu0 %v1244
        %1552 = vmatmul.mubr.bf16.gmra.mrb[0].mxu0 %v1243
        %v1553 = vpop.f32.mrb[0].mxu0
        %v1554 = vadd.f32 %v1302, %v1553
        %v1555 = vpop.f32.mrb[0].mxu0
        %v1556 = vadd.f32 %v1306, %v1555
        %v1557 = vpop.f32.mrb[0].mxu0
        %v1558 = vadd.f32 %v1302, %v1557
        %v1559 = vpop.f32.mrb[0].mxu0
        %v1560 = vadd.f32 %v1306, %v1559
        %1561 = vmatprep.mubr.bf16.mxu0 %v1246
        %1562 = vmatmul.mubr.bf16.gmra.mrb[0].mxu0 %v1245
        %v1563 = vpop.f32.mrb[0].mxu0
        %v1564 = vadd.f32 %v1302, %v1563
        %v1565 = vpop.f32.mrb[0].mxu0
        %v1566 = vadd.f32 %v1306, %v1565
        %v1567 = vpop.f32.mrb[0].mxu0
        %v1568 = vadd.f32 %v1302, %v1567
        %v1569 = vpop.f32.mrb[0].mxu0
        %v1570 = vadd.f32 %v1306, %v1569
        %1571 = vmatprep.mubr.bf16.mxu0 %v1248
        %1572 = vmatmul.mubr.bf16.gmra.mrb[0].mxu0 %v1247
        %v1573 = vpop.f32.mrb[0].mxu0
        %v1574 = vadd.f32 %v1302, %v1573
        %v1575 = vpop.f32.mrb[0].mxu0
        %v1576 = vadd.f32 %v1306, %v1575
        %v1577 = vpop.f32.mrb[0].mxu0
        %v1578 = vadd.f32 %v1302, %v1577
        %v1579 = vpop.f32.mrb[0].mxu0
        %v1580 = vadd.f32 %v1306, %v1579
        %1581 = vmatprep.mubr.bf16.mxu0 %v1250
        %1582 = vmatmul.mubr.bf16.gmra.mrb[0].mxu0 %v1249
        %v1583 = vpop.f32.mrb[0].mxu0
        %v1584 = vadd.f32 %v1302, %v1583
        %v1585 = vpop.f32.mrb[0].mxu0
        %v1586 = vadd.f32 %v1306, %v1585
        %v1587 = vpop.f32.mrb[0].mxu0
        %v1588 = vadd.f32 %v1302, %v1587
        %v1589 = vpop.f32.mrb[0].mxu0
        %v1590 = vadd.f32 %v1306, %v1589
        %1591 = vmatprep.mubr.bf16.mxu0 %v1252
        %1592 = vmatmul.mubr.bf16.gmra.mrb[0].mxu0 %v1251
        %v1593 = vpop.f32.mrb[0].mxu0
        %v1594 = vadd.f32 %v1302, %v1593
        %v1595 = vpop.f32.mrb[0].mxu0
        %v1596 = vadd.f32 %v1306, %v1595
        %v1597 = vpop.f32.mrb[0].mxu0
        %v1598 = vadd.f32 %v1302, %v1597
        %v1599 = vpop.f32.mrb[0].mxu0
        %v1600 = vadd.f32 %v1306, %v1599
        %1601 = vmatprep.mubr.bf16.mxu0 %v1254
        %1602 = vmatmul.mubr.bf16.gmra.mrb[0].mxu0 %v1253
        %v1603 = vpop.f32.mrb[0].mxu0
        %v1604 = vadd.f32 %v1302, %v1603
        %v1605 = vpop.f32.mrb[0].mxu0
        %v1606 = vadd.f32 %v1306, %v1605
        %v1607 = vpop.f32.mrb[0].mxu0
        %v1608 = vadd.f32 %v1302, %v1607
        %v1609 = vpop.f32.mrb[0].mxu0
        %v1610 = vadd.f32 %v1306, %v1609
        %1611 = vmatprep.mubr.bf16.mxu0 %v1256
        %1612 = vmatmul.mubr.bf16.gmra.mrb[0].mxu0 %v1255
        %v1613 = vpop.f32.mrb[0].mxu0
        %v1614 = vadd.f32 %v1302, %v1613
        %v1615 = vpop.f32.mrb[0].mxu0
        %v1616 = vadd.f32 %v1306, %v1615
        %v1617 = vpop.f32.mrb[0].mxu0
        %v1618 = vadd.f32 %v1302, %v1617
        %v1619 = vpop.f32.mrb[0].mxu0
        %v1620 = vadd.f32 %v1306, %v1619
        %1621 = vmatprep.mubr.bf16.mxu0 %v1258
        %1622 = vmatmul.mubr.bf16.gmra.mrb[0].mxu0 %v1257
        %v1623 = vpop.f32.mrb[0].mxu0
        %v1624 = vadd.f32 %v1302, %v1623
        %v1625 = vpop.f32.mrb[0].mxu0
        %v1626 = vadd.f32 %v1306, %v1625
        %v1627 = vpop.f32.mrb[0].mxu0
        %v1628 = vadd.f32 %v1302, %v1627
        %v1629 = vpop.f32.mrb[0].mxu0
        %v1630 = vadd.f32 %v1306, %v1629
        %1631 = vmatprep.mubr.bf16.mxu0 %v1260
        %1632 = vmatmul.mubr.bf16.gmra.mrb[0].mxu0 %v1259
        %v1633 = vpop.f32.mrb[0].mxu0
        %v1634 = vadd.f32 %v1302, %v1633
        %v1635 = vpop.f32.mrb[0].mxu0
        %v1636 = vadd.f32 %v1306, %v1635
        %v1637 = vpop.f32.mrb[0].mxu0
        %v1638 = vadd.f32 %v1302, %v1637
        %v1639 = vpop.f32.mrb[0].mxu0
        %v1640 = vadd.f32 %v1306, %v1639
        %1641 = vmatprep.mubr.bf16.mxu0 %v1262
        %1642 = vmatmul.mubr.bf16.gmra.mrb[0].mxu0 %v1261
        %v1643 = vpop.f32.mrb[0].mxu0
        %v1644 = vadd.f32 %v1302, %v1643
        %v1645 = vpop.f32.mrb[0].mxu0
        %v1646 = vadd.f32 %v1306, %v1645
        %v1647 = vpop.f32.mrb[0].mxu0
        %v1648 = vadd.f32 %v1302, %v1647
        %v1649 = vpop.f32.mrb[0].mxu0
        %v1650 = vadd.f32 %v1306, %v1649
        %1651 = vmatprep.mubr.bf16.mxu0 %v1264
        %1652 = vmatmul.mubr.bf16.gmra.mrb[0].mxu0 %v1263
        %v1653 = vpop.f32.mrb[0].mxu0
        %v1654 = vadd.f32 %v1302, %v1653
        %v1655 = vpop.f32.mrb[0].mxu0
        %v1656 = vadd.f32 %v1306, %v1655
        %v1657 = vpop.f32.mrb[0].mxu0
        %v1658 = vadd.f32 %v1302, %v1657
        %v1659 = vpop.f32.mrb[0].mxu0
        %v1660 = vadd.f32 %v1306, %v1659
        %1661 = vdwg.mxu0
        %v1662 = vtanh.pop %v1504
        %v1663 = vtanh.pop %v1506
        %v1664 = vtanh.pop %v1508
        %v1665 = vtanh.pop %v1510
        %v1666 = vtanh.pop %v1514
        %v1667 = vtanh.pop %v1516
        %v1668 = vtanh.pop %v1518
        %v1669 = vtanh.pop %v1520
        %v1670 = vtanh.pop %v1524
        %v1671 = vtanh.pop %v1526
        %v1672 = vtanh.pop %v1528
        %v1673 = vtanh.pop %v1530
        %v1674 = vtanh.pop %v1534
        %v1675 = vtanh.pop %v1536
        %v1676 = vtanh.pop %v1538
        %v1677 = vtanh.pop %v1540
        %v1678 = vtanh.pop %v1544
        %v1679 = vtanh.pop %v1546
        %v1680 = vtanh.pop %v1548
        %v1681 = vtanh.pop %v1550
        %v1682 = vtanh.pop %v1554
        %v1683 = vtanh.pop %v1556
        %v1684 = vtanh.pop %v1558
        %v1685 = vtanh.pop %v1560
        %v1686 = vtanh.pop %v1564
        %v1687 = vtanh.pop %v1566
        %v1688 = vtanh.pop %v1568
        %v1689 = vtanh.pop %v1570
        %v1690 = vtanh.pop %v1574
        %v1691 = vtanh.pop %v1576
        %v1692 = vtanh.pop %v1578
        %v1693 = vtanh.pop %v1580
        %v1694 = vtanh.pop %v1584
        %v1695 = vtanh.pop %v1586
        %v1696 = vtanh.pop %v1588
        %v1697 = vtanh.pop %v1590
        %v1698 = vtanh.pop %v1594
        %v1699 = vtanh.pop %v1596
        %v1700 = vtanh.pop %v1598
        %v1701 = vtanh.pop %v1600
        %v1702 = vtanh.pop %v1604
        %v1703 = vtanh.pop %v1606
        %v1704 = vtanh.pop %v1608
        %v1705 = vtanh.pop %v1610
        %v1706 = vtanh.pop %v1614
        %v1707 = vtanh.pop %v1616
        %v1708 = vtanh.pop %v1618
        %v1709 = vtanh.pop %v1620
        %v1710 = vtanh.pop %v1624
        %v1711 = vtanh.pop %v1626
        %v1712 = vtanh.pop %v1628
        %v1713 = vtanh.pop %v1630
        %v1714 = vtanh.pop %v1634
        %v1715 = vtanh.pop %v1636
        %v1716 = vtanh.pop %v1638
        %v1717 = vtanh.pop %v1640
        %v1718 = vtanh.pop %v1644
        %v1719 = vtanh.pop %v1646
        %v1720 = vtanh.pop %v1648
        %v1721 = vtanh.pop %v1650
        %v1722 = vtanh.pop %v1654
        %v1723 = vtanh.pop %v1656
        %v1724 = vtanh.pop %v1658
        %v1725 = vtanh.pop %v1660
        %v1726 = vpack.c.bf16 %v1664, %v1662
        %v1727 = vpack.c.bf16 %v1665, %v1663
        %v1728 = vpack.c.bf16 %v1668, %v1666
        %v1729 = vpack.c.bf16 %v1669, %v1667
        %v1730 = vpack.c.bf16 %v1672, %v1670
        %v1731 = vpack.c.bf16 %v1673, %v1671
        %v1732 = vpack.c.bf16 %v1676, %v1674
        %v1733 = vpack.c.bf16 %v1677, %v1675
        %v1734 = vpack.c.bf16 %v1680, %v1678
        %v1735 = vpack.c.bf16 %v1681, %v1679
        %v1736 = vpack.c.bf16 %v1684, %v1682
        %v1737 = vpack.c.bf16 %v1685, %v1683
        %v1738 = vpack.c.bf16 %v1688, %v1686
        %v1739 = vpack.c.bf16 %v1689, %v1687
        %v1740 = vpack.c.bf16 %v1692, %v1690
        %v1741 = vpack.c.bf16 %v1693, %v1691
        %v1742 = vpack.c.bf16 %v1696, %v1694
        %v1743 = vpack.c.bf16 %v1697, %v1695
        %v1744 = vpack.c.bf16 %v1700, %v1698
        %v1745 = vpack.c.bf16 %v1701, %v1699
        %v1746 = vpack.c.bf16 %v1704, %v1702
        %v1747 = vpack.c.bf16 %v1705, %v1703
        %v1748 = vpack.c.bf16 %v1708, %v1706
        %v1749 = vpack.c.bf16 %v1709, %v1707
        %v1750 = vpack.c.bf16 %v1712, %v1710
        %v1751 = vpack.c.bf16 %v1713, %v1711
        %v1752 = vpack.c.bf16 %v1716, %v1714
        %v1753 = vpack.c.bf16 %v1717, %v1715
        %v1754 = vpack.c.bf16 %v1720, %v1718
        %v1755 = vpack.c.bf16 %v1721, %v1719
        %v1756 = vpack.c.bf16 %v1724, %v1722
        %v1757 = vpack.c.bf16 %v1725, %v1723
        %v1758 = vld [vmem:[%s7] sm:$0xf]
        %v1759 = vld [vmem:[%s7 + $0x4] sm:$0xf]
        %v1760 = vld [vmem:[%s7 + $0x8] sm:$0xf]
        %v1761 = vld [vmem:[%s7 + $0xc] sm:$0xf]
        %v1762 = vld [vmem:[%s7 + $0x10] sm:$0xf]
        %v1763 = vld [vmem:[%s7 + $0x14] sm:$0xf]
        %v1764 = vld [vmem:[%s7 + $0x18] sm:$0xf]
        %v1765 = vld [vmem:[%s7 + $0x1c] sm:$0xf]
        %v1766 = vld [vmem:[%s7 + $0x20] sm:$0xf]
        %v1767 = vld [vmem:[%s7 + $0x24] sm:$0xf]
        %v1768 = vld [vmem:[%s7 + $0x28] sm:$0xf]
        %v1769 = vld [vmem:[%s7 + $0x2c] sm:$0xf]
        %v1770 = vld [vmem:[%s7 + $0x30] sm:$0xf]
        %v1771 = vld [vmem:[%s7 + $0x34] sm:$0xf]
        %v1772 = vld [vmem:[%s7 + $0x38] sm:$0xf]
        %v1773 = vld [vmem:[%s7 + $0x3c] sm:$0xf]
        %v1774 = vld [vmem:[%s7 + $0x40] sm:$0xf]
        %v1775 = vld [vmem:[%s7 + $0x44] sm:$0xf]
        %v1776 = vld [vmem:[%s7 + $0x48] sm:$0xf]
        %v1777 = vld [vmem:[%s7 + $0x4c] sm:$0xf]
        %v1778 = vld [vmem:[%s7 + $0x50] sm:$0xf]
        %v1779 = vld [vmem:[%s7 + $0x54] sm:$0xf]
        %v1780 = vld [vmem:[%s7 + $0x58] sm:$0xf]
        %v1781 = vld [vmem:[%s7 + $0x5c] sm:$0xf]
        %v1782 = vld [vmem:[%s7 + $0x60] sm:$0xf]
        %v1783 = vld [vmem:[%s7 + $0x64] sm:$0xf]
        %v1784 = vld [vmem:[%s7 + $0x68] sm:$0xf]
        %v1785 = vld [vmem:[%s7 + $0x6c] sm:$0xf]
        %v1786 = vld [vmem:[%s7 + $0x70] sm:$0xf]
        %v1787 = vld [vmem:[%s7 + $0x74] sm:$0xf]
        %v1788 = vld [vmem:[%s7 + $0x78] sm:$0xf]
        %v1789 = vld [vmem:[%s7 + $0x7c] sm:$0xf]
        %v1790 = vld [vmem:[%s8] sm:$0x1]
        %v1792 = vlaneseq
        %v1793 = vshrl.u32 %v1792, 7
        %v1794 = vsub.s32 0, %v1793
        %v1795 = vrot.slane %v1790, %v1794
        %v1829 = vunpack.c.l.b16 %v1758
        %v1830 = vunpack.c.l.b16 %v1759
        %v1831 = vunpack.c.l.b16 %v1760
        %v1832 = vunpack.c.l.b16 %v1761
        %v1833 = vunpack.c.l.b16 %v1762
        %v1834 = vunpack.c.l.b16 %v1763
        %v1835 = vunpack.c.l.b16 %v1764
        %v1836 = vunpack.c.l.b16 %v1765
        %v1837 = vunpack.c.l.b16 %v1766
        %v1838 = vunpack.c.l.b16 %v1767
        %v1839 = vunpack.c.l.b16 %v1768
        %v1840 = vunpack.c.l.b16 %v1769
        %v1841 = vunpack.c.l.b16 %v1770
        %v1842 = vunpack.c.l.b16 %v1771
        %v1843 = vunpack.c.l.b16 %v1772
        %v1844 = vunpack.c.l.b16 %v1773
        %v1845 = vunpack.c.l.b16 %v1774
        %v1846 = vunpack.c.l.b16 %v1775
        %v1847 = vunpack.c.l.b16 %v1776
        %v1848 = vunpack.c.l.b16 %v1777
        %v1849 = vunpack.c.l.b16 %v1778
        %v1850 = vunpack.c.l.b16 %v1779
        %v1851 = vunpack.c.l.b16 %v1780
        %v1852 = vunpack.c.l.b16 %v1781
        %v1853 = vunpack.c.l.b16 %v1782
        %v1854 = vunpack.c.l.b16 %v1783
        %v1855 = vunpack.c.l.b16 %v1784
        %v1856 = vunpack.c.l.b16 %v1785
        %v1857 = vunpack.c.l.b16 %v1786
        %v1858 = vunpack.c.l.b16 %v1787
        %v1859 = vunpack.c.l.b16 %v1788
        %v1860 = vunpack.c.l.b16 %v1789
        %v1861 = vpack.c.b16 %v1830, %v1829
        %v1862 = vpack.c.b16 %v1832, %v1831
        %v1863 = vpack.c.b16 %v1834, %v1833
        %v1864 = vpack.c.b16 %v1836, %v1835
        %v1865 = vpack.c.b16 %v1838, %v1837
        %v1866 = vpack.c.b16 %v1840, %v1839
        %v1867 = vpack.c.b16 %v1842, %v1841
        %v1868 = vpack.c.b16 %v1844, %v1843
        %v1869 = vpack.c.b16 %v1846, %v1845
        %v1870 = vpack.c.b16 %v1848, %v1847
        %v1871 = vpack.c.b16 %v1850, %v1849
        %v1872 = vpack.c.b16 %v1852, %v1851
        %v1873 = vpack.c.b16 %v1854, %v1853
        %v1874 = vpack.c.b16 %v1856, %v1855
        %v1875 = vpack.c.b16 %v1858, %v1857
        %v1876 = vpack.c.b16 %v1860, %v1859
        %1893 = vmatprep.subr.bf16.mxu0 0
        %1894 = vmatpush1.bf16.msra.mxu0 %v1861
        %1895 = vmatprep.subr.bf16.mxu0 0
        %1896 = vmatpush1.bf16.msra.mxu0 %v1862
        %1897 = vmatprep.subr.bf16.mxu0 0
        %1898 = vmatpush1.bf16.msra.mxu0 %v1863
        %1899 = vmatprep.subr.bf16.mxu0 0
        %1900 = vmatpush1.bf16.msra.mxu0 %v1864
        %1901 = vmatprep.subr.bf16.mxu0 0
        %1902 = vmatpush1.bf16.msra.mxu0 %v1865
        %1903 = vmatprep.subr.bf16.mxu0 0
        %1904 = vmatpush1.bf16.msra.mxu0 %v1866
        %1905 = vmatprep.subr.bf16.mxu0 0
        %1906 = vmatpush1.bf16.msra.mxu0 %v1867
        %1907 = vmatprep.subr.bf16.mxu0 0
        %1908 = vmatpush1.bf16.msra.mxu0 %v1868
        %1909 = vmatprep.subr.bf16.mxu0 0
        %1910 = vmatpush1.bf16.msra.mxu0 %v1869
        %1911 = vmatprep.subr.bf16.mxu0 0
        %1912 = vmatpush1.bf16.msra.mxu0 %v1870
        %1913 = vmatprep.subr.bf16.mxu0 0
        %1914 = vmatpush1.bf16.msra.mxu0 %v1871
        %1915 = vmatprep.subr.bf16.mxu0 0
        %1916 = vmatpush1.bf16.msra.mxu0 %v1872
        %1917 = vmatprep.subr.bf16.mxu0 0
        %1918 = vmatpush1.bf16.msra.mxu0 %v1873
        %1919 = vmatprep.subr.bf16.mxu0 0
        %1920 = vmatpush1.bf16.msra.mxu0 %v1874
        %1921 = vmatprep.subr.bf16.mxu0 0
        %1922 = vmatpush1.bf16.msra.mxu0 %v1875
        %1923 = vmatprep.subr.bf16.mxu0 0
        %1924 = vmatpush1.bf16.msra.mxu0 %v1876
        %1925 = vmatprep.mubr.bf16.mxu0 %v1727
        %1926 = vmatmul.mubr.bf16.gmra.mrb[0].mxu0 %v1726
        %v1927 = vpop.f32.mrb[0].mxu0
        %v1928 = vadd.f32 %v1795, %v1927
        %v1929 = vpop.f32.mrb[0].mxu0
        %v1930 = vpop.f32.mrb[0].mxu0
        %v1931 = vadd.f32 %v1795, %v1930
        %v1932 = vpop.f32.mrb[0].mxu0
        %1933 = vmatprep.mubr.bf16.mxu0 %v1729
        %1934 = vmatmul.mubr.bf16.gmra.mrb[0].mxu0 %v1728
        %v1935 = vpop.f32.mrb[0].mxu0
        %v1936 = vadd.f32 %v1795, %v1935
        %v1937 = vpop.f32.mrb[0].mxu0
        %v1938 = vpop.f32.mrb[0].mxu0
        %v1939 = vadd.f32 %v1795, %v1938
        %v1940 = vpop.f32.mrb[0].mxu0
        %1941 = vmatprep.mubr.bf16.mxu0 %v1731
        %1942 = vmatmul.mubr.bf16.gmra.mrb[0].mxu0 %v1730
        %v1943 = vpop.f32.mrb[0].mxu0
        %v1944 = vadd.f32 %v1795, %v1943
        %v1945 = vpop.f32.mrb[0].mxu0
        %v1946 = vpop.f32.mrb[0].mxu0
        %v1947 = vadd.f32 %v1795, %v1946
        %v1948 = vpop.f32.mrb[0].mxu0
        %1949 = vmatprep.mubr.bf16.mxu0 %v1733
        %1950 = vmatmul.mubr.bf16.gmra.mrb[0].mxu0 %v1732
        %v1951 = vpop.f32.mrb[0].mxu0
        %v1952 = vadd.f32 %v1795, %v1951
        %v1953 = vpop.f32.mrb[0].mxu0
        %v1954 = vpop.f32.mrb[0].mxu0
        %v1955 = vadd.f32 %v1795, %v1954
        %v1956 = vpop.f32.mrb[0].mxu0
        %1957 = vmatprep.mubr.bf16.mxu0 %v1735
        %1958 = vmatmul.mubr.bf16.gmra.mrb[0].mxu0 %v1734
        %v1959 = vpop.f32.mrb[0].mxu0
        %v1960 = vadd.f32 %v1795, %v1959
        %v1961 = vpop.f32.mrb[0].mxu0
        %v1962 = vpop.f32.mrb[0].mxu0
        %v1963 = vadd.f32 %v1795, %v1962
        %v1964 = vpop.f32.mrb[0].mxu0
        %1965 = vmatprep.mubr.bf16.mxu0 %v1737
        %1966 = vmatmul.mubr.bf16.gmra.mrb[0].mxu0 %v1736
        %v1967 = vpop.f32.mrb[0].mxu0
        %v1968 = vadd.f32 %v1795, %v1967
        %v1969 = vpop.f32.mrb[0].mxu0
        %v1970 = vpop.f32.mrb[0].mxu0
        %v1971 = vadd.f32 %v1795, %v1970
        %v1972 = vpop.f32.mrb[0].mxu0
        %1973 = vmatprep.mubr.bf16.mxu0 %v1739
        %1974 = vmatmul.mubr.bf16.gmra.mrb[0].mxu0 %v1738
        %v1975 = vpop.f32.mrb[0].mxu0
        %v1976 = vadd.f32 %v1795, %v1975
        %v1977 = vpop.f32.mrb[0].mxu0
        %v1978 = vpop.f32.mrb[0].mxu0
        %v1979 = vadd.f32 %v1795, %v1978
        %v1980 = vpop.f32.mrb[0].mxu0
        %1981 = vmatprep.mubr.bf16.mxu0 %v1741
        %1982 = vmatmul.mubr.bf16.gmra.mrb[0].mxu0 %v1740
        %v1983 = vpop.f32.mrb[0].mxu0
        %v1984 = vadd.f32 %v1795, %v1983
        %v1985 = vpop.f32.mrb[0].mxu0
        %v1986 = vpop.f32.mrb[0].mxu0
        %v1987 = vadd.f32 %v1795, %v1986
        %v1988 = vpop.f32.mrb[0].mxu0
        %1989 = vmatprep.mubr.bf16.mxu0 %v1743
        %1990 = vmatmul.mubr.bf16.gmra.mrb[0].mxu0 %v1742
        %v1991 = vpop.f32.mrb[0].mxu0
        %v1992 = vadd.f32 %v1795, %v1991
        %v1993 = vpop.f32.mrb[0].mxu0
        %v1994 = vpop.f32.mrb[0].mxu0
        %v1995 = vadd.f32 %v1795, %v1994
        %v1996 = vpop.f32.mrb[0].mxu0
        %1997 = vmatprep.mubr.bf16.mxu0 %v1745
        %1998 = vmatmul.mubr.bf16.gmra.mrb[0].mxu0 %v1744
        %v1999 = vpop.f32.mrb[0].mxu0
        %v2000 = vadd.f32 %v1795, %v1999
        %v2001 = vpop.f32.mrb[0].mxu0
        %v2002 = vpop.f32.mrb[0].mxu0
        %v2003 = vadd.f32 %v1795, %v2002
        %v2004 = vpop.f32.mrb[0].mxu0
        %2005 = vmatprep.mubr.bf16.mxu0 %v1747
        %2006 = vmatmul.mubr.bf16.gmra.mrb[0].mxu0 %v1746
        %v2007 = vpop.f32.mrb[0].mxu0
        %v2008 = vadd.f32 %v1795, %v2007
        %v2009 = vpop.f32.mrb[0].mxu0
        %v2010 = vpop.f32.mrb[0].mxu0
        %v2011 = vadd.f32 %v1795, %v2010
        %v2012 = vpop.f32.mrb[0].mxu0
        %2013 = vmatprep.mubr.bf16.mxu0 %v1749
        %2014 = vmatmul.mubr.bf16.gmra.mrb[0].mxu0 %v1748
        %v2015 = vpop.f32.mrb[0].mxu0
        %v2016 = vadd.f32 %v1795, %v2015
        %v2017 = vpop.f32.mrb[0].mxu0
        %v2018 = vpop.f32.mrb[0].mxu0
        %v2019 = vadd.f32 %v1795, %v2018
        %v2020 = vpop.f32.mrb[0].mxu0
        %2021 = vmatprep.mubr.bf16.mxu0 %v1751
        %2022 = vmatmul.mubr.bf16.gmra.mrb[0].mxu0 %v1750
        %v2023 = vpop.f32.mrb[0].mxu0
        %v2024 = vadd.f32 %v1795, %v2023
        %v2025 = vpop.f32.mrb[0].mxu0
        %v2026 = vpop.f32.mrb[0].mxu0
        %v2027 = vadd.f32 %v1795, %v2026
        %v2028 = vpop.f32.mrb[0].mxu0
        %2029 = vmatprep.mubr.bf16.mxu0 %v1753
        %2030 = vmatmul.mubr.bf16.gmra.mrb[0].mxu0 %v1752
        %v2031 = vpop.f32.mrb[0].mxu0
        %v2032 = vadd.f32 %v1795, %v2031
        %v2033 = vpop.f32.mrb[0].mxu0
        %v2034 = vpop.f32.mrb[0].mxu0
        %v2035 = vadd.f32 %v1795, %v2034
        %v2036 = vpop.f32.mrb[0].mxu0
        %2037 = vmatprep.mubr.bf16.mxu0 %v1755
        %2038 = vmatmul.mubr.bf16.gmra.mrb[0].mxu0 %v1754
        %v2039 = vpop.f32.mrb[0].mxu0
        %v2040 = vadd.f32 %v1795, %v2039
        %v2041 = vpop.f32.mrb[0].mxu0
        %v2042 = vpop.f32.mrb[0].mxu0
        %v2043 = vadd.f32 %v1795, %v2042
        %v2044 = vpop.f32.mrb[0].mxu0
        %2045 = vmatprep.mubr.bf16.mxu0 %v1757
        %2046 = vmatmul.mubr.bf16.gmra.mrb[0].mxu0 %v1756
        %v2047 = vpop.f32.mrb[0].mxu0
        %v2048 = vadd.f32 %v1795, %v2047
        %v2049 = vpop.f32.mrb[0].mxu0
        %v2050 = vpop.f32.mrb[0].mxu0
        %v2051 = vadd.f32 %v1795, %v2050
        %v2052 = vpop.f32.mrb[0].mxu0
        %2053 = vdwg.mxu0
        %2054 = vst [vmem:[%s341] sm:$0xff] %v1928
        %2055 = vst [vmem:[%s341 + $0x8] sm:$0xff] %v1931
        %2056 = vst [vmem:[%s341 + $0x10] sm:$0xff] %v1936
        %2057 = vst [vmem:[%s341 + $0x18] sm:$0xff] %v1939
        %2058 = vst [vmem:[%s341 + $0x20] sm:$0xff] %v1944
        %2059 = vst [vmem:[%s341 + $0x28] sm:$0xff] %v1947
        %2060 = vst [vmem:[%s341 + $0x30] sm:$0xff] %v1952
        %2061 = vst [vmem:[%s341 + $0x38] sm:$0xff] %v1955
        %2062 = vst [vmem:[%s341 + $0x40] sm:$0xff] %v1960
        %2063 = vst [vmem:[%s341 + $0x48] sm:$0xff] %v1963
        %2064 = vst [vmem:[%s341 + $0x50] sm:$0xff] %v1968
        %2065 = vst [vmem:[%s341 + $0x58] sm:$0xff] %v1971
        %2066 = vst [vmem:[%s341 + $0x60] sm:$0xff] %v1976
        %2067 = vst [vmem:[%s341 + $0x68] sm:$0xff] %v1979
        %2068 = vst [vmem:[%s341 + $0x70] sm:$0xff] %v1984
        %2069 = vst [vmem:[%s341 + $0x78] sm:$0xff] %v1987
        %2070 = vst [vmem:[%s341 + $0x80] sm:$0xff] %v1992
        %2071 = vst [vmem:[%s341 + $0x88] sm:$0xff] %v1995
        %2072 = vst [vmem:[%s341 + $0x90] sm:$0xff] %v2000
        %2073 = vst [vmem:[%s341 + $0x98] sm:$0xff] %v2003
        %2074 = vst [vmem:[%s341 + $0xa0] sm:$0xff] %v2008
        %2075 = vst [vmem:[%s341 + $0xa8] sm:$0xff] %v2011
        %2076 = vst [vmem:[%s341 + $0xb0] sm:$0xff] %v2016
        %2077 = vst [vmem:[%s341 + $0xb8] sm:$0xff] %v2019
        %2078 = vst [vmem:[%s341 + $0xc0] sm:$0xff] %v2024
        %2079 = vst [vmem:[%s341 + $0xc8] sm:$0xff] %v2027
        %2080 = vst [vmem:[%s341 + $0xd0] sm:$0xff] %v2032
        %2081 = vst [vmem:[%s341 + $0xd8] sm:$0xff] %v2035
        %2082 = vst [vmem:[%s341 + $0xe0] sm:$0xff] %v2040
        %2083 = vst [vmem:[%s341 + $0xe8] sm:$0xff] %v2043
        %2084 = vst [vmem:[%s341 + $0xf0] sm:$0xff] %v2048
        %2085 = vst [vmem:[%s341 + $0xf8] sm:$0xff] %v2051
        %s2086 = sand.u32 %s226, 1
        %s2087 = scalar_lea.sflag [#allocation4], %s2086
        %s2088 = sand.u32 %s226, 1
        %s2089 = smul.addr %s2088, 256
        %s2090 = scalar_lea.vmem [#allocation5], %s2089
        // Predicated region
        $region61: #{tpu_custom_call.1} parent=55 // pred_check
          %p2091 = pneg %p236
        $region62: #{tpu_custom_call.1} parent=55 // pred_check_branch
          %2093 = sbr.rel (%p2091) target = $region64
        $region63: #{tpu_custom_call.1} parent=55 // pred_region
          %s2094 = smul.u32 32, %s24
          %s2096 = ssub.s32 4096, 4096
          %2097 = vsyncadd %s2087, %s2096
          %s2098 = smul.addr %s2094, 128
          %s2099 = scalar_lea.hbm %s9, %s2098
          %s2100 = sshll.u32 %s2090, 4
          %s2101 = int_to_ptr.vmem [resolvable:$true] %s2100
          %2106 = dma.vmem_to_hbm [thread:$0]  %s2101, 4096, %s2099, %s2087, 128, 128, 8
        $region64: #{tpu_custom_call.1} parent=55 // pred_fallthru
          _
      $region56: #{tpu_custom_call.1} parent=5 // pred_fallthru
        _
      %p2107 = scmp.le.s32.totalorder 2, %s19
      // Predicated region
      $region65: #{tpu_custom_call.1} parent=5 // pred_check
        %p2108 = pneg %p2107
      $region66: #{tpu_custom_call.1} parent=5 // pred_check_branch
        %2110 = sbr.rel (%p2108) target = $region68
      $region67: #{tpu_custom_call.1} parent=5 // pred_region
        %s2111 = ssub.s32 %s19, 2
        // Predicated region
        $region69: #{tpu_custom_call.1} parent=67 // pred_check
          %p2112 = pneg %p242
        $region70: #{tpu_custom_call.1} parent=67 // pred_check_branch
          %2114 = sbr.rel (%p2112) target = $region72
        $region71: #{tpu_custom_call.1} parent=67 // pred_region
          %s2115 = sand.u32 %s227, 1
          %s2116 = scalar_lea.sflag [#allocation4], %s2115
          %s2117 = sand.u32 %s227, 1
          %s2118 = smul.addr %s2117, 256
          %s2119 = scalar_lea.vmem [#allocation5], %s2118
          %2120 = dma.done %s2116, 4096
        $region72: #{tpu_custom_call.1} parent=67 // pred_fallthru
          _
      $region68: #{tpu_custom_call.1} parent=5 // pred_fallthru
        _
    $region6: #{tpu_custom_call.1} parent=1 // loop_footer
      %s23 = sadd.s32 1, %s19
    $region7: #{tpu_custom_call.1} parent=1 // loop_footer_branch
      %18 = sbr.rel target = $region3
    $region8: #{tpu_custom_call.1} parent=1 // loop_exit
      _
    %2121 = vsyncpa [#allocation3], 1
    %s2122 = scalar_lea.sflag [#allocation3], 1
    %2123 = vsyncpa %s2122, 1
    %2124 = vsyncpa [#allocation4], 1
    %s2125 = scalar_lea.sflag [#allocation4], 1
    %2126 = vsyncpa %s2125, 1

</llo_original>
